<compile_context>
chip_gen: v6e
topology: v6e:2x2x1
jax: 0.10.0
libtpu: 0.0.40
codegen_flags: <defaults>
</compile_context>

<pallas_src>
import functools

import jax
import jax.numpy as jnp
from jax import lax
from jax.experimental import pallas as pl
from jax.experimental.pallas import tpu as pltpu


def _round_up(x, m):
    return ((x + m - 1) // m) * m


def _pad_to(x, shape):
    pads = [(0, s - d) for d, s in zip(x.shape, shape)]
    if all(p == (0, 0) for p in pads):
        return x
    return jnp.pad(x, pads)


def _compute_vmem_limit():
    # Per-generation scoped-VMEM budget (v5e/v6e: 128 MiB physical, v7x: 64 MiB).
    try:
        cap = pltpu.get_tpu_info().vmem_capacity_bytes
        return max(32 * 1024 * 1024, min(int(cap * 0.6), 80 * 1024 * 1024))
    except Exception:
        return 48 * 1024 * 1024


_VMEM_LIMIT = _compute_vmem_limit()


def _pick_tile(d, cands=(512, 256, 128)):
    dp = _round_up(d, 128)
    for c in cands:
        if dp % c == 0:
            return c
    return 128


# ----------------------------------------------------------------------------
# Generic tiled matmul with fused affine epilogue (bf16 operands, f32 acc)
# Also used for every stride-1 1x1 convolution (flattened over N*H*W).
# ----------------------------------------------------------------------------
def _matmul_affine_kernel(a_ref, b_ref, sb_ref, o_ref, acc_ref, *, act):
    @pl.when(pl.program_id(2) == 0)
    def _():
        acc_ref[...] = jnp.zeros_like(acc_ref)

    acc_ref[...] += jnp.dot(a_ref[...], b_ref[...],
                            preferred_element_type=jnp.float32)

    @pl.when(pl.program_id(2) == pl.num_programs(2) - 1)
    def _():
        r = acc_ref[...] * sb_ref[0:1, :] + sb_ref[1:2, :]
        if act == "relu":
            r = jnp.maximum(r, 0.0)
        elif act == "sigmoid":
            r = jax.nn.sigmoid(r)
        o_ref[...] = r.astype(o_ref.dtype)


def matmul_affine(a, b, scale=None, bias=None, act="none",
                  out_dtype=jnp.bfloat16):
    """act(a @ b * scale + bias), per-column scale/bias (folded BN / conv bias)."""
    M, K = a.shape
    _, N = b.shape
    if scale is None:
        scale = jnp.ones((N,), jnp.float32)
    if bias is None:
        bias = jnp.zeros((N,), jnp.float32)
    if M >= 1024:
        tm = 512
    elif M >= 256:
        tm = 256
    else:
        tm = 128
    tk = _pick_tile(K)
    tn = _pick_tile(N)
    Mp, Kp, Np = _round_up(M, tm), _round_up(K, tk), _round_up(N, tn)
    a_p = _pad_to(a.astype(jnp.bfloat16), (Mp, Kp))
    b_p = _pad_to(b.astype(jnp.bfloat16), (Kp, Np))
    sb = jnp.stack([_pad_to(scale.astype(jnp.float32), (Np,)),
                    _pad_to(bias.astype(jnp.float32), (Np,))])
    grid = (Mp // tm, Np // tn, Kp // tk)
    out = pl.pallas_call(
        functools.partial(_matmul_affine_kernel, act=act),
        out_shape=jax.ShapeDtypeStruct((Mp, Np), out_dtype),
        grid_spec=pltpu.PrefetchScalarGridSpec(
            num_scalar_prefetch=0,
            grid=grid,
            in_specs=[
                pl.BlockSpec((tm, tk), lambda i, j, k: (i, k)),
                pl.BlockSpec((tk, tn), lambda i, j, k: (k, j)),
                pl.BlockSpec((2, tn), lambda i, j, k: (0, j)),
            ],
            out_specs=pl.BlockSpec((tm, tn), lambda i, j, k: (i, j)),
            scratch_shapes=[pltpu.VMEM((tm, tn), jnp.float32)],
        ),
        compiler_params=pltpu.CompilerParams(
            dimension_semantics=("parallel", "parallel", "arbitrary"),
            vmem_limit_bytes=_VMEM_LIMIT),
    )(a_p, b_p, sb)
    return out[:M, :N]


# ----------------------------------------------------------------------------
# Direct (no-im2col) stride-1 convolution kernel for k > 1 kernels
# ----------------------------------------------------------------------------
def _direct_conv_kernel(*refs, taps, act, has_res, ho, wo, wb):
    if has_res:
        x_ref, w_ref, sb_ref, res_ref, o_ref, acc_ref = refs
    else:
        x_ref, w_ref, sb_ref, o_ref, acc_ref = refs
        res_ref = None
    k = pl.program_id(2)

    @pl.when(k == 0)
    def _():
        acc_ref[...] = jnp.zeros_like(acc_ref)

    macc = acc_ref.shape[0]
    # One accumulator read + one write per K step (taps summed on a local value).
    # Row shifts (i*wb) are sublane-aligned because wb % 8 == 0; only the kw
    # column offsets remain unaligned.
    acc = acc_ref[...]
    for t, shift in enumerate(taps):
        acc = acc + jnp.dot(x_ref[0, shift:shift + macc, :], w_ref[t],
                            preferred_element_type=jnp.float32)
    acc_ref[...] = acc

    @pl.when(k == pl.num_programs(2) - 1)
    def _():
        r = acc * sb_ref[0:1, :] + sb_ref[1:2, :]
        cc = r.shape[-1]
        r = r.reshape(ho, wb, cc)                       # wb % 8 == 0: layout-safe
        if has_res:
            v = res_ref[0].astype(jnp.float32)          # (ho, wo, cc)
            if wb > wo:
                v = jnp.concatenate(
                    [v, jnp.zeros((ho, wb - wo, cc), jnp.float32)], axis=1)
            r = r + v
        if act == "relu":
            r = jnp.maximum(r, 0.0)
        elif act == "sigmoid":
            r = jax.nn.sigmoid(r)
        o_ref[...] = r[None].astype(o_ref.dtype)


def _select_conv_tiles(Mtot, Macc, Cin_p, Cout_p, khw, has_res, res_rows):
    """Pick (tci, tco) preferring a 256-wide output tile, against a VMEM budget."""
    tci_c = [c for c in (512, 256, 128) if Cin_p % c == 0] or [Cin_p]
    tco_c = [c for c in (256, 128) if Cout_p % c == 0] or [Cout_p]
    budget = int(_VMEM_LIMIT * 0.85)

    def est(tci, tco):
        return (2 * Mtot * tci * 2 +            # x block (bf16, double-buffered)
                2 * khw * tci * tco * 2 +       # weight block
                2 * Macc * tco * 2 +            # output block (bf16)
                3 * Macc * tco * 4 +            # f32 acc scratch + live temporaries
                (2 * res_rows * tco * 2 if has_res else 0))

    for tco in tco_c:
        for tci in tci_c:
            if est(tci, tco) <= budget:
                return tci, tco
    return tci_c[-1], tco_c[-1]


def conv2d_direct(x_nhwc, w_oihw, padding=(0, 0), scale=None, bias=None,
                  act="none", residual=None):
    """Stride-1 k>1 conv: flattened-image shifted matmuls, taps accumulated in-kernel.
    Optional fused residual add (same shape as the conv output) in the epilogue."""
    N, H, W, Cin = x_nhwc.shape
    Cout, _, kh, kw = w_oihw.shape
    ph, pw = padding
    Hp, Wp = H + 2 * ph, W + 2 * pw
    Ho, Wo = Hp - kh + 1, Wp - kw + 1
    Wb = _round_up(Wp, 8)                   # sublane-align the row stride
    Mtot = (Hp + 1) * Wb                    # +1 row so the last taps stay in-bounds
    Macc = Ho * Wb

    xb = x_nhwc.astype(jnp.bfloat16)
    xb = jnp.pad(xb, ((0, 0), (ph, ph + 1), (pw, Wb - W - pw), (0, 0)))
    xf = xb.reshape(N, Mtot, Cin)

    Cin_p = Cin if Cin <= 128 else _round_up(Cin, 128)
    if Cin_p != Cin:
        xf = _pad_to(xf, (N, Mtot, Cin_p))
    Cout_p = _round_up(Cout, 128)

    tci, tco = _select_conv_tiles(Mtot, Macc, Cin_p, Cout_p, kh * kw,
                                  residual is not None, Ho * Wo)

    wt = jnp.transpose(w_oihw, (2, 3, 1, 0)).reshape(kh * kw, Cin, Cout)
    wt = _pad_to(wt, (kh * kw, Cin_p, Cout_p)).astype(jnp.bfloat16)
    if scale is None:
        scale = jnp.ones((Cout,), jnp.float32)
    if bias is None:
        bias = jnp.zeros((Cout,), jnp.float32)
    sb = jnp.stack([_pad_to(scale.astype(jnp.float32), (Cout_p,)),
                    _pad_to(bias.astype(jnp.float32), (Cout_p,))])

    taps = tuple(i * Wb + j for i in range(kh) for j in range(kw))

    in_specs = [
        pl.BlockSpec((1, Mtot, tci), lambda n, j, k: (n, 0, k)),
        pl.BlockSpec((kh * kw, tci, tco), lambda n, j, k: (0, k, j)),
        pl.BlockSpec((2, tco), lambda n, j, k: (0, j)),
    ]
    args = [xf, wt, sb]
    if residual is not None:
        assert residual.shape == (N, Ho, Wo, Cout), (residual.shape, (N, Ho, Wo, Cout))
        resp = residual
        if Cout_p != Cout:
            resp = _pad_to(resp, (N, Ho, Wo, Cout_p))
        in_specs.append(pl.BlockSpec((1, Ho, Wo, tco), lambda n, j, k: (n, 0, 0, j)))
        args.append(resp)

    grid = (N, Cout_p // tco, Cin_p // tci)
    out = pl.pallas_call(
        functools.partial(_direct_conv_kernel, taps=taps, act=act,
                          has_res=residual is not None, ho=Ho, wo=Wo, wb=Wb),
        out_shape=jax.ShapeDtypeStruct((N, Ho, Wb, Cout_p), jnp.bfloat16),
        grid_spec=pltpu.PrefetchScalarGridSpec(
            num_scalar_prefetch=0,
            grid=grid,
            in_specs=in_specs,
            out_specs=pl.BlockSpec((1, Ho, Wb, tco), lambda n, j, k: (n, 0, 0, j)),
            scratch_shapes=[pltpu.VMEM((Macc, tco), jnp.float32)],
        ),
        compiler_params=pltpu.CompilerParams(
            dimension_semantics=("parallel", "parallel", "arbitrary"),
            vmem_limit_bytes=_VMEM_LIMIT),
    )(*args)
    return out[:, :, :Wo, :Cout]


def conv2d_1x1(x_nhwc, w_oihw, scale=None, bias=None, act="none"):
    """Stride-1 1x1 conv as a fully tiled (M/N/K) matmul over N*H*W rows."""
    N, H, W, Cin = x_nhwc.shape
    Cout = w_oihw.shape[0]
    a = x_nhwc.reshape(N * H * W, Cin)
    wmat = w_oihw[:, :, 0, 0].T
    out = matmul_affine(a, wmat, scale, bias, act=act)
    return out.reshape(N, H, W, Cout)


def conv2d_im2col(x_nhwc, w_oihw, stride=(1, 1), padding=(0, 0),
                  scale=None, bias=None, act="none"):
    """Fallback for strided / tiny-Cin convs: im2col (JAX glue) + Pallas matmul."""
    Cout, Cin, kh, kw = w_oihw.shape
    N, H, W, _ = x_nhwc.shape
    sh, sw = stride
    ph, pw = padding
    xp = jnp.pad(x_nhwc.astype(jnp.bfloat16),
                 ((0, 0), (ph, ph), (pw, pw), (0, 0)))
    Ho = (H + 2 * ph - kh) // sh + 1
    Wo = (W + 2 * pw - kw) // sw + 1
    cols = []
    for i in range(kh):
        for j in range(kw):
            cols.append(xp[:, i:i + sh * (Ho - 1) + 1:sh,
                           j:j + sw * (Wo - 1) + 1:sw, :])
    patches = jnp.concatenate(cols, axis=-1).reshape(N * Ho * Wo, kh * kw * Cin)
    wmat = jnp.transpose(w_oihw, (2, 3, 1, 0)).reshape(kh * kw * Cin, Cout)
    out = matmul_affine(patches, wmat, scale, bias, act=act)
    return out.reshape(N, Ho, Wo, Cout)


def conv2d(x_nhwc, w_oihw, stride=(1, 1), padding=(0, 0),
           scale=None, bias=None, act="none", residual=None):
    Cout, Cin, kh, kw = w_oihw.shape
    if stride == (1, 1) and kh == 1 and kw == 1:
        assert padding == (0, 0) and residual is None
        return conv2d_1x1(x_nhwc, w_oihw, scale, bias, act)
    if stride == (1, 1) and Cin >= 16:
        return conv2d_direct(x_nhwc, w_oihw, padding, scale, bias, act, residual)
    assert residual is None
    return conv2d_im2col(x_nhwc, w_oihw, stride, padding, scale, bias, act)


# ----------------------------------------------------------------------------
# Elementwise fusions with in-kernel broadcasting (bf16 I/O, f32 math)
# ----------------------------------------------------------------------------
def _ew_kernel(a_ref, b_ref, o_ref, *, op):
    a = a_ref[...].astype(jnp.float32)
    b = b_ref[...].astype(jnp.float32)
    if op == "mul":
        r = a * b
    elif op == "mul_plus1":
        r = a * (b + 1.0)
    elif op == "add_relu":
        r = jnp.maximum(a + b, 0.0)
    elif op == "add_sigmoid":
        r = jax.nn.sigmoid(a + b)
    else:
        raise ValueError(op)
    o_ref[...] = r.astype(o_ref.dtype)


def elementwise(a, b, op):
    """Fused binary op; b may be full-shape, (N,1,1,C) or (N,H,W,1) (kernel bcast)."""
    orig_shape = a.shape
    if a.ndim == 2:
        N, C = a.shape
        HW = 1
        a3 = a.reshape(N, 1, C)
        b3 = jnp.broadcast_to(b, a.shape).reshape(N, 1, C)
        mode = "full"
    else:
        N, H, W, C = a.shape
        HW = H * W
        a3 = a.reshape(N, HW, C)
        if b.shape == a.shape:
            b3 = b.reshape(N, HW, C)
            mode = "full"
        elif b.shape == (N, 1, 1, C):
            b3 = b.reshape(N, 1, C)
            mode = "chan"
        elif b.shape == (N, H, W, 1):
            b3 = b.reshape(N, HW, 1)
            mode = "spat"
        else:
            b3 = jnp.broadcast_to(b, a.shape).reshape(N, HW, C)
            mode = "full"
    thw = HW if HW <= 2048 else 2048
    if mode == "full":
        b_spec = pl.BlockSpec((1, thw, C), lambda n, h: (n, h, 0))
    elif mode == "chan":
        b_spec = pl.BlockSpec((1, 1, C), lambda n, h: (n, 0, 0))
    else:
        b_spec = pl.BlockSpec((1, thw, 1), lambda n, h: (n, h, 0))
    out = pl.pallas_call(
        functools.partial(_ew_kernel, op=op),
        out_shape=jax.ShapeDtypeStruct((N, HW, C), jnp.bfloat16),
        grid_spec=pltpu.PrefetchScalarGridSpec(
            num_scalar_prefetch=0,
            grid=(N, pl.cdiv(HW, thw)),
            in_specs=[pl.BlockSpec((1, thw, C), lambda n, h: (n, h, 0)), b_spec],
            out_specs=pl.BlockSpec((1, thw, C), lambda n, h: (n, h, 0)),
        ),
        compiler_params=pltpu.CompilerParams(
            dimension_semantics=("parallel", "parallel")),
    )(a3, b3)
    return out.reshape(orig_shape)


# ----------------------------------------------------------------------------
# Pooling kernels (tiled H*W reductions)
# ----------------------------------------------------------------------------
def _gpool_kernel(x_ref, avg_ref, max_ref, sum_sc, max_sc, *, hw):
    blk = pl.program_id(1)

    @pl.when(blk == 0)
    def _():
        sum_sc[...] = jnp.zeros_like(sum_sc)
        max_sc[...] = jnp.full_like(max_sc, -jnp.inf)

    x = x_ref[...].astype(jnp.float32)                  # (1, tp, C)
    tp = x.shape[1]
    row = lax.broadcasted_iota(jnp.int32, x.shape, 1)
    valid = (row + blk * tp) < hw
    sum_sc[...] += jnp.sum(jnp.where(valid, x, 0.0), axis=1, keepdims=True)
    max_sc[...] = jnp.maximum(
        max_sc[...],
        jnp.max(jnp.where(valid, x, -jnp.inf), axis=1, keepdims=True))

    @pl.when(blk == pl.num_programs(1) - 1)
    def _():
        avg_ref[...] = sum_sc[...] * (1.0 / hw)
        max_ref[...] = max_sc[...]


def global_pool(x_nhwc):
    """AdaptiveAvgPool2d(1) + AdaptiveMaxPool2d(1) -> (N, C), (N, C)."""
    N, H, W, C = x_nhwc.shape
    HW = H * W
    xf = x_nhwc.reshape(N, HW, C)
    tp = HW if HW <= 512 else 512
    avg, mx = pl.pallas_call(
        functools.partial(_gpool_kernel, hw=HW),
        out_shape=(jax.ShapeDtypeStruct((N, 1, C), jnp.float32),
                   jax.ShapeDtypeStruct((N, 1, C), jnp.float32)),
        grid_spec=pltpu.PrefetchScalarGridSpec(
            num_scalar_prefetch=0,
            grid=(N, pl.cdiv(HW, tp)),
            in_specs=[pl.BlockSpec((1, tp, C), lambda n, b: (n, b, 0))],
            out_specs=(pl.BlockSpec((1, 1, C), lambda n, b: (n, 0, 0)),
                       pl.BlockSpec((1, 1, C), lambda n, b: (n, 0, 0))),
            scratch_shapes=[pltpu.VMEM((1, 1, C), jnp.float32),
                            pltpu.VMEM((1, 1, C), jnp.float32)],
        ),
        compiler_params=pltpu.CompilerParams(
            dimension_semantics=("parallel", "arbitrary")),
    )(xf)
    return avg.reshape(N, C), mx.reshape(N, C)


def _cpool_kernel(x_ref, avg_ref, max_ref):
    x = x_ref[...].astype(jnp.float32)                  # (1, tp, C)
    avg_ref[...] = jnp.mean(x, axis=2)[:, None, :]      # lane-dense (1, 1, tp)
    max_ref[...] = jnp.max(x, axis=2)[:, None, :]


def channel_pool(x_nhwc):
    """mean/max over channel dim (SpatialAttention) -> (N,H,W,1) each."""
    N, H, W, C = x_nhwc.shape
    HW = H * W
    xf = x_nhwc.reshape(N, HW, C)
    tp = HW if HW <= 512 else 512
    avg, mx = pl.pallas_call(
        _cpool_kernel,
        out_shape=(jax.ShapeDtypeStruct((N, 1, HW), jnp.float32),
                   jax.ShapeDtypeStruct((N, 1, HW), jnp.float32)),
        grid_spec=pltpu.PrefetchScalarGridSpec(
            num_scalar_prefetch=0,
            grid=(N, pl.cdiv(HW, tp)),
            in_specs=[pl.BlockSpec((1, tp, C), lambda n, b: (n, b, 0))],
            out_specs=(pl.BlockSpec((1, 1, tp), lambda n, b: (n, 0, b)),
                       pl.BlockSpec((1, 1, tp), lambda n, b: (n, 0, b))),
        ),
        compiler_params=pltpu.CompilerParams(
            dimension_semantics=("parallel", "parallel")),
    )(xf)
    return avg.reshape(N, H, W, 1), mx.reshape(N, H, W, 1)


# ----------------------------------------------------------------------------
# Conv / BN / misc building blocks
# ----------------------------------------------------------------------------
def bn_fold(gamma, beta, mean, var, eps=1e-5):
    s = gamma / jnp.sqrt(var + eps)
    return s, beta - mean * s


def apply_basic_conv(p, x, stride=(1, 1), padding=(0, 0), act="none",
                     residual=None):
    s, b = bn_fold(**p["bn"])
    return conv2d(x, p["w"], stride=stride, padding=padding,
                  scale=s, bias=b, act=act, residual=residual)


def apply_basic_block(p, x):
    out = apply_basic_conv(p["c1"], x, padding=(1, 1), act="relu")
    # conv2 + BN + residual add + relu fused into one kernel epilogue
    return apply_basic_conv(p["c2"], out, padding=(1, 1), act="relu", residual=x)


def apply_channel_attention(p, x):
    N, H, W, C = x.shape
    avg, mx = global_pool(x)
    w1 = p["fc1"][:, :, 0, 0].T          # (C, C//16)
    w2 = p["fc2"][:, :, 0, 0].T          # (C//16, C)
    z = jnp.concatenate([avg, mx], axis=0)               # (2N, C): one MLP pass
    h = matmul_affine(z, w1, act="relu")
    y = matmul_affine(h, w2)
    out = elementwise(y[:N], y[N:], "add_sigmoid")       # (N, C)
    return out.reshape(N, 1, 1, C)


def apply_spatial_attention(w, x):
    avg, mx = channel_pool(x)
    cat = jnp.concatenate([avg, mx], axis=-1)             # (N,H,W,2)
    return conv2d(cat, w, padding=(3, 3), act="sigmoid")  # (N,H,W,1)


def apply_nca(p, x):
    """NewChannelAttention."""
    x = apply_basic_conv(p["conv"], x, act="relu")
    N, H, W, C = x.shape
    avg, _ = global_pool(x)
    y1 = matmul_affine(avg, p["lin1"].T, act="relu")
    y1 = matmul_affine(y1, p["lin2"].T, act="sigmoid")     # (N, C)
    y = elementwise(x, y1.reshape(N, 1, 1, C), "mul")
    # conv2 + BN + residual(y) add + relu fused into the conv epilogue
    return apply_basic_conv(p["conv2"], y, padding=(1, 1), act="relu", residual=y)


def apply_gated_conv(p, feat, gate):
    x = jnp.concatenate([feat, gate], axis=-1)             # 512 channels
    a = apply_nca(p["nca"], x)
    # fold standalone BN(256) into the following 1x1 conv (input-channel affine)
    s1, b1 = bn_fold(**p["bn1"])
    w1 = p["c1_w"] * s1.reshape(1, -1, 1, 1)
    bias1 = p["c1_b"] + jnp.einsum("oi,i->o", p["c1_w"][:, :, 0, 0], b1)
    a = conv2d(a, w1, bias=bias1, act="relu")
    # fold BN(1) into the 256->1 conv epilogue, then sigmoid
    s2, b2 = bn_fold(**p["bn2"])
    a = conv2d(a, p["c2_w"], scale=s2, bias=p["c2_b"] * s2 + b2, act="sigmoid")
    y = elementwise(feat, a, "mul_plus1")                  # feat * (att + 1)
    return apply_basic_conv(p["conv1"], y, padding=(1, 1))


def upsample_bilinear_ac(x_nhwc, factor):
    """bilinear, align_corners=True (JAX glue via separable interp matrices)."""
    N, H, W, C = x_nhwc.shape
    Ho, Wo = H * factor, W * factor

    def interp_mat(n_in, n_out):
        if n_in == 1:
            return jnp.ones((n_out, 1), jnp.float32)
        src = jnp.arange(n_out, dtype=jnp.float32) * (n_in - 1) / (n_out - 1)
        lo = jnp.floor(src).astype(jnp.int32)
        hi = jnp.minimum(lo + 1, n_in - 1)
        frac = src - lo.astype(jnp.float32)
        m = jnp.zeros((n_out, n_in), jnp.float32)
        m = m.at[jnp.arange(n_out), lo].add(1.0 - frac)
        m = m.at[jnp.arange(n_out), hi].add(frac)
        return m

    Mh = interp_mat(H, Ho)
    Mw = interp_mat(W, Wo)
    y = jnp.einsum("oh,nhwc->nowc", Mh, x_nhwc)
    y = jnp.einsum("pw,nowc->nopc", Mw, y)
    return y.astype(x_nhwc.dtype)


def maxpool_3x3_s2(x_nhwc):
    neg = jnp.asarray(-jnp.inf, x_nhwc.dtype)
    return lax.reduce_window(x_nhwc, neg, lax.max,
                             (1, 3, 3, 1), (1, 2, 2, 1),
                             ((0, 0), (1, 1), (1, 1), (0, 0)))


def apply_cfm(p, x1, x2, x3, x4, x5):
    up = functools.partial(upsample_bilinear_ac, factor=2)
    x1_1 = conv2d(x1, p["conv1_w"], bias=p["conv1_b"])
    x2_1 = x2
    x3_1 = conv2d(apply_basic_conv(p["cu3"], up(x3), padding=(1, 1)),
                  p["conv3_w"], bias=p["conv3_b"])
    x4_1 = conv2d(apply_basic_conv(p["cu4"], up(up(x4)), padding=(1, 1)),
                  p["conv4_w"], bias=p["conv4_b"])
    x5_1 = conv2d(apply_basic_conv(p["cu5"], up(up(up(x5))), padding=(1, 1)),
                  p["conv5_w"], bias=p["conv5_b"])
    x = jnp.concatenate([x1_1, x2_1, x3_1, x4_1, x5_1], axis=-1)   # 1280 ch
    x = apply_basic_conv(p["cc1"], x, padding=(1, 1))
    N, H, W, _ = x.shape
    # NCHW reshape(-1,5,256,H,W) -> transpose(1,2) -> reshape(-1,1280,H,W),
    # replicated on the channels-last axis (same interleave semantics).
    f1 = x.reshape(N, H, W, 5, 256).transpose(0, 1, 2, 4, 3).reshape(N, H, W, 1280)
    slices = [f1[..., 256 * i:256 * (i + 1)] for i in range(5)]

    def branch(a, b):
        cc = apply_basic_conv(p["cc2"], jnp.concatenate([a, b], axis=-1),
                              padding=(1, 1))
        return conv2d(cc, p["conv2_w"], bias=p["conv2_b"])

    firsts = [x1_1, x2_1, x3_1, x4_1, x5_1]
    return tuple(branch(a, b) for a, b in zip(firsts, slices))


# ----------------------------------------------------------------------------
# Deterministic parameter initialization (shapes from the module __init__)
# ----------------------------------------------------------------------------
def init_params():
    key = jax.random.PRNGKey(0)
    cnt = [0]

    def nk():
        cnt[0] += 1
        return jax.random.fold_in(key, cnt[0])

    def cw(co, ci, kh, kw):
        std = (2.0 / (ci * kh * kw)) ** 0.5
        return jax.random.normal(nk(), (co, ci, kh, kw), jnp.float32) * std

    def cb(co):
        return jnp.zeros((co,), jnp.float32)

    def bn(c):
        return dict(gamma=jnp.ones((c,), jnp.float32),
                    beta=jnp.zeros((c,), jnp.float32),
                    mean=jnp.zeros((c,), jnp.float32),
                    var=jnp.ones((c,), jnp.float32))

    def bconv(ci, co, kh, kw):
        return dict(w=cw(co, ci, kh, kw), bn=bn(co))

    def lin(co, ci):
        return jax.random.normal(nk(), (co, ci), jnp.float32) * (2.0 / ci) ** 0.5

    def nca(ci, co):
        return dict(conv=bconv(ci, co, 1, 1), lin1=lin(co // 4, co),
                    lin2=lin(co, co // 4), conv2=bconv(co, co, 3, 3))

    def gconv():
        return dict(nca=nca(512, 256), bn1=bn(256),
                    c1_w=cw(256, 256, 1, 1), c1_b=cb(256),
                    c2_w=cw(1, 256, 1, 1), c2_b=cb(1), bn2=bn(1),
                    conv1=bconv(256, 256, 3, 3))

    def bblock(c):
        return dict(c1=bconv(c, c, 3, 3), c2=bconv(c, c, 3, 3))

    sobel = jnp.array([[-1, -1, -1], [-1, 8, -1], [-1, -1, -1]],
                      jnp.float32) / 3.0
    sobel_w = jnp.broadcast_to(sobel, (3, 3, 3, 3))     # (Cout,Cin,3,3), all equal

    return dict(
        # backbone stub (res2next50 not available)
        rn_conv1=bconv(3, 64, 7, 7),
        rn_l1=bconv(64, 256, 3, 3),
        rn_l2=bconv(256, 512, 3, 3),
        rn_l3=bconv(512, 1024, 3, 3),
        rn_l4=bconv(1024, 2048, 3, 3),
        cfm=dict(
            cu3=bconv(512, 512, 3, 3), cu4=bconv(1024, 1024, 3, 3),
            cu5=bconv(2048, 2048, 3, 3),
            conv1_w=cw(256, 64, 1, 1), conv1_b=cb(256),
            cc1=bconv(1280, 1280, 3, 3), cc2=bconv(512, 512, 3, 3),
            conv3_w=cw(256, 512, 1, 1), conv3_b=cb(256),
            conv4_w=cw(256, 1024, 1, 1), conv4_b=cb(256),
            conv5_w=cw(256, 2048, 1, 1), conv5_b=cb(256),
            conv2_w=cw(256, 512, 1, 1), conv2_b=cb(256),
        ),
        ca=dict(fc1=cw(16, 256, 1, 1), fc2=cw(256, 16, 1, 1)),
        sa_w=cw(1, 2, 7, 7),
        toconv=bconv(512, 256, 1, 1),
        rb1=bblock(256), rb2=bblock(256), rb3=bblock(256),
        conv1_7=bconv(3, 256, 1, 7),
        conv7_1=bconv(3, 256, 7, 1),
        branch1_conv_w=cw(1, 256, 1, 1), branch1_conv_b=cb(1),
        branch1_conv2=bconv(4, 8, 1, 1),
        branch2_conv_w=cw(1, 256, 1, 1), branch2_conv_b=cb(1),
        branch2_conv2=bconv(4, 8, 1, 1),
        gc1=gconv(), gc2=gconv(), gc3=gconv(),
        conv=bconv(16, 16, 3, 3),
        conv1=bconv(16, 1, 1, 1),
        downchannel=nca(16, 16),
        sobel_w=sobel_w,
    )


# ----------------------------------------------------------------------------
# Boundarydetection forward
# ----------------------------------------------------------------------------
def forward(P, x_nchw):
    x = jnp.transpose(x_nchw, (0, 2, 3, 1)).astype(jnp.float32)   # NHWC

    # --- backbone stub (res2next50 replaced; channels/strides match the usage) ---
    x1 = apply_basic_conv(P["rn_conv1"], x, stride=(2, 2), padding=(3, 3), act="relu")
    x1 = maxpool_3x3_s2(x1)                                       # (N, H/4, W/4, 64)
    x2 = apply_basic_conv(P["rn_l1"], x1, padding=(1, 1), act="relu")          # 256
    x3 = apply_basic_conv(P["rn_l2"], x2, stride=(2, 2), padding=(1, 1), act="relu")   # 512
    x4 = apply_basic_conv(P["rn_l3"], x3, stride=(2, 2), padding=(1, 1), act="relu")   # 1024
    x5 = apply_basic_conv(P["rn_l4"], x4, stride=(2, 2), padding=(1, 1), act="relu")   # 2048

    _, _, res3_2, res4_2, res5_2 = apply_cfm(P["cfm"], x1, x2, x3, x4, x5)

    def ma(r):
        ca = apply_channel_attention(P["ca"], r)
        sa = apply_spatial_attention(P["sa_w"], r)
        a = elementwise(r, ca, "mul")
        b = elementwise(r, sa, "mul")
        return apply_basic_conv(P["toconv"], jnp.concatenate([a, b], axis=-1))

    res3_3 = ma(res3_2)
    res4_3 = ma(res4_2)
    res5_3 = ma(res5_2)

    # sobel edge conv (fixed weights)
    edge = conv2d(x, P["sobel_w"], padding=(1, 1))

    # --- branch 1 ---
    b1 = apply_basic_conv(P["conv1_7"], x, stride=(4, 4), padding=(0, 3))
    b1 = apply_basic_block(P["rb1"], b1)
    b1 = apply_gated_conv(P["gc1"], res3_3, b1)
    b1 = apply_basic_block(P["rb2"], b1)
    b1 = apply_gated_conv(P["gc2"], res4_3, b1)
    b1 = apply_basic_block(P["rb3"], b1)
    b1 = apply_gated_conv(P["gc3"], res5_3, b1)
    b1 = conv2d(b1, P["branch1_conv_w"], bias=P["branch1_conv_b"])
    b1 = upsample_bilinear_ac(b1, 4)
    branch1_x = apply_basic_conv(P["branch1_conv2"],
                                 jnp.concatenate([edge, b1], axis=-1))

    # --- branch 2 (shares resblock2 / gateconv3 exactly as in the original forward) ---
    b2 = apply_basic_conv(P["conv7_1"], x, stride=(4, 4), padding=(3, 0))
    b2 = apply_basic_block(P["rb1"], b2)
    b2 = apply_gated_conv(P["gc1"], res3_3, b2)
    b2 = apply_basic_block(P["rb2"], b2)
    b2 = apply_gated_conv(P["gc3"], res4_3, b2)
    b2 = apply_basic_block(P["rb2"], b2)
    b2 = apply_gated_conv(P["gc3"], res5_3, b2)
    b2 = conv2d(b2, P["branch2_conv_w"], bias=P["branch2_conv_b"])
    b2 = upsample_bilinear_ac(b2, 4)
    branch2_x = apply_basic_conv(P["branch2_conv2"],
                                 jnp.concatenate([edge, b2], axis=-1))

    result = jnp.concatenate([branch1_x, branch2_x], axis=-1)     # 16 channels
    r = apply_basic_conv(P["conv"], result, padding=(1, 1))
    r = apply_nca(P["downchannel"], r)
    r = apply_basic_conv(P["conv1"], r)                           # 16 -> 1
    return jnp.transpose(r, (0, 3, 1, 2)).astype(jnp.float32)     # NCHW


if __name__ == "__main__":
    # Small test shape (original net expects 352x352; scaled down, see TODO above).
    x = jax.random.normal(jax.random.PRNGKey(0), (1, 3, 64, 64), jnp.float32)
    params = init_params()
    out = forward(params, x)
    out = jax.block_until_ready(out)
    assert out.shape == (1, 1, 64, 64), out.shape
    assert bool(jnp.all(jnp.isfinite(out)))
    print("KERNEL_OK")
</pallas_src>

<mosaic_0001>
module attributes {stable_mosaic.version = 11 : i64} {
  func.func @_matmul_affine_kernel(%arg0: i32, %arg1: i32, %arg2: i32, %arg3: memref<512x256xbf16, #tpu.memory_space<vmem>>, %arg4: memref<256x128xbf16, #tpu.memory_space<vmem>>, %arg5: memref<2x128xf32, #tpu.memory_space<vmem>>, %arg6: memref<512x128xbf16, #tpu.memory_space<vmem>>, %arg7: memref<512x128xf32, #tpu.memory_space<vmem>>) attributes {dimension_semantics = [#tpu.dimension_semantics<parallel>, #tpu.dimension_semantics<parallel>, #tpu.dimension_semantics<arbitrary>], iteration_bounds = array<i64: 2, 1, 1>, scalar_prefetch = 0 : i64, scratch_operands = 1 : i64, tpu.core_type = #tpu.core_type<tc>, window_params = [{transform_indices = @transform_0, window_bounds = array<i64: 512, 256>}, {transform_indices = @transform_1, window_bounds = array<i64: 256, 128>}, {transform_indices = @transform_2, window_bounds = array<i64: 2, 128>}, {transform_indices = @transform_3, window_bounds = array<i64: 512, 128>}]} {
    %c0_i32 = arith.constant 0 : i32
    %0 = arith.cmpi eq, %arg2, %c0_i32 : i32
    %1 = arith.extui %0 : i1 to i32
    %c0_i32_0 = arith.constant 0 : i32
    %2 = arith.cmpi ne, %1, %c0_i32_0 : i32
    scf.if %2 {
      %cst_10 = arith.constant 0.000000e+00 : f32
      %12 = vector.broadcast %cst_10 : f32 to vector<512x128xf32>
      %c0_11 = arith.constant 0 : index
      %c0_12 = arith.constant 0 : index
      %13 = vector.load %arg7[%c0_11, %c0_12] : memref<512x128xf32, #tpu.memory_space<vmem>>, vector<512x128xf32>
      tpu.vector_store %arg7[%c0_11, %c0_12], %12 {strides = array<i32>} : memref<512x128xf32, #tpu.memory_space<vmem>>, vector<512x128xf32>,
    } else {
    }
    %c0 = arith.constant 0 : index
    %c0_1 = arith.constant 0 : index
    %3 = vector.load %arg7[%c0, %c0_1] : memref<512x128xf32, #tpu.memory_space<vmem>>, vector<512x128xf32>
    %c0_2 = arith.constant 0 : index
    %c0_3 = arith.constant 0 : index
    %4 = vector.load %arg3[%c0_2, %c0_3] : memref<512x256xbf16, #tpu.memory_space<vmem>>, vector<512x256xbf16>
    %c0_4 = arith.constant 0 : index
    %c0_5 = arith.constant 0 : index
    %5 = vector.load %arg4[%c0_4, %c0_5] : memref<256x128xbf16, #tpu.memory_space<vmem>>, vector<256x128xbf16>
    %cst = arith.constant dense<0.000000e+00> : vector<512x128xf32>
    %6 = tpu.matmul %4, %5, %cst {dimension_numbers = #tpu.dot_dimension_numbers<[1], [0], [0], [1], [0, 0, 1, 1], [], []>} : vector<512x256xbf16>, vector<256x128xbf16>, vector<512x128xf32> -> vector<512x128xf32>
    %7 = arith.addf %3, %6 : vector<512x128xf32>
    %c0_6 = arith.constant 0 : index
    %c0_7 = arith.constant 0 : index
    %8 = vector.load %arg7[%c0_6, %c0_7] : memref<512x128xf32, #tpu.memory_space<vmem>>, vector<512x128xf32>
    tpu.vector_store %arg7[%c0_6, %c0_7], %7 {strides = array<i32>} : memref<512x128xf32, #tpu.memory_space<vmem>>, vector<512x128xf32>,
    %c0_i32_8 = arith.constant 0 : i32
    %9 = arith.cmpi eq, %arg2, %c0_i32_8 : i32
    %10 = arith.extui %9 : i1 to i32
    %c0_i32_9 = arith.constant 0 : i32
    %11 = arith.cmpi ne, %10, %c0_i32_9 : i32
    scf.if %11 {
      %c0_10 = arith.constant 0 : index
      %c0_11 = arith.constant 0 : index
      %12 = vector.load %arg7[%c0_10, %c0_11] : memref<512x128xf32, #tpu.memory_space<vmem>>, vector<512x128xf32>
      %c0_12 = arith.constant 0 : index
      %c0_13 = arith.constant 0 : index
      %13 = vector.load %arg5[%c0_12, %c0_13] : memref<2x128xf32, #tpu.memory_space<vmem>>, vector<1x128xf32>
      %14 = vector.broadcast %13 : vector<1x128xf32> to vector<512x128xf32>
      %15 = arith.mulf %12, %14 : vector<512x128xf32>
      %c1 = arith.constant 1 : index
      %c0_14 = arith.constant 0 : index
      %16 = vector.load %arg5[%c1, %c0_14] : memref<2x128xf32, #tpu.memory_space<vmem>>, vector<1x128xf32>
      %17 = vector.broadcast %16 : vector<1x128xf32> to vector<512x128xf32>
      %18 = arith.addf %15, %17 : vector<512x128xf32>
      %cst_15 = arith.constant 0.000000e+00 : f32
      %19 = vector.broadcast %cst_15 : f32 to vector<512x128xf32>
      %20 = arith.maximumf %18, %19 : vector<512x128xf32>
      %21 = arith.truncf %20 : vector<512x128xf32> to vector<512x128xbf16>
      %c0_16 = arith.constant 0 : index
      %c0_17 = arith.constant 0 : index
      %22 = vector.load %arg6[%c0_16, %c0_17] : memref<512x128xbf16, #tpu.memory_space<vmem>>, vector<512x128xbf16>
      tpu.vector_store %arg6[%c0_16, %c0_17], %21 {strides = array<i32>} : memref<512x128xbf16, #tpu.memory_space<vmem>>, vector<512x128xbf16>,
    } else {
    }
    return
  }
  func.func @transform_0(%arg0: i32, %arg1: i32, %arg2: i32) -> (i32, i32) {
    %c0_i32 = arith.constant 0 : i32
    return %arg0, %arg2 : i32, i32
  }
  func.func @transform_1(%arg0: i32, %arg1: i32, %arg2: i32) -> (i32, i32) {
    %c0_i32 = arith.constant 0 : i32
    return %arg2, %arg1 : i32, i32
  }
  func.func @transform_2(%arg0: i32, %arg1: i32, %arg2: i32) -> (i32, i32) {
    %c0_i32 = arith.constant 0 : i32
    %c0_i32_0 = arith.constant 0 : i32
    return %c0_i32, %arg1 : i32, i32
  }
  func.func @transform_3(%arg0: i32, %arg1: i32, %arg2: i32) -> (i32, i32) {
    %c0_i32 = arith.constant 0 : i32
    return %arg0, %arg1 : i32, i32
  }
}

</mosaic_0001>

<llo_original>
// kernel: tpu_custom_call.1
$region0: #{tpu_custom_call.1}
  #allocation0 [shape = 'u32[]', space=smem, size = 0x4, offset = 0x4, fixed_abs, tag = 'smem constant byte address 0x4 - core index']
  #allocation1 [shape = 'u32[144,128]{1,0:T(1,128)}', space=vmem, size = 0x12000, scoped, tag = 'internal scratch']
  #allocation2 [shape = 'f32[512,128]{1,0:T(8,128)}', space=vmem, size = 0x40000, scoped, tag = 'scratch operand']
  %s0 = inlined_call_operand.hbm [shape: bf16[1024,256], index: 0, kind: input, shape index: {}]
  %s1 = inlined_call_operand.hbm [shape: bf16[256,128], index: 1, kind: input, shape index: {}]
  %s2 = inlined_call_operand.vmem [shape: f32[2,128], index: 2, kind: input, shape index: {}]
  %s3 = inlined_call_operand.hbm [shape: bf16[1024,128], index: 3, kind: output, shape index: {}]
  %s4 = sld [smem:[#allocation0]]
  $region61: #{tpu_custom_call.1} parent=0
    _
  %s6 = ssub.s32 1, %s4
  %s7 = scalar_select 0, %s6, %s4
  $region1: #{tpu_custom_call.1} parent=0
    #allocation3 [shape = 'u8[524288]{0}', space=vmem, size = 0x80000, scoped, tag = 'input window, operand 0']
    #allocation4 [shape = 's32[2]{0}', space=sflag, size = 0x8, scoped, tag = 'scoped memory for tpu_custom_call.1']
    #allocation5 [shape = 's32[2]{0}', space=sflag, size = 0x8, scoped, tag = 'scoped memory for tpu_custom_call.1']
    #allocation6 [shape = 'u8[65536]{0}', space=vmem, size = 0x10000, scoped, tag = 'input window, operand 1, single buffered']
    #allocation7 [shape = 's32[1]{0}', space=sflag, size = 0x4, scoped, tag = 'scoped memory for tpu_custom_call.1']
    #allocation8 [shape = 'u8[262144]{0}', space=vmem, size = 0x40000, scoped, tag = 'output window, operand 0']
    %8 = vsyncpa [#allocation4], 0
    %s9 = scalar_lea.sflag [#allocation4], 1
    %10 = vsyncpa %s9, 0
    %11 = vsyncpa [#allocation7], 0
    %12 = vsyncpa [#allocation5], 0
    %s13 = scalar_lea.sflag [#allocation5], 1
    %14 = vsyncpa %s13, 0
    loop: start=0, step=1, limit=4
    $region2: #{tpu_custom_call.1} parent=1 // loop_pre_header
      _
    $region3: #{tpu_custom_call.1} parent=1 // loop_header
      %s16 = sphi 0, %s20
      %p17 = scmp.ge.s32.totalorder %s16, 4
      %s23 = sphi 0, %s42
      %s24 = sphi 0, %s38
      %s25 = sphi 0, %s34
      %s26 = sphi 0, %s23
      %s27 = sphi 0, %s24
      %s28 = sphi 0, %s25
      %s29 = sphi 0, %s26
      %s30 = sphi 0, %s27
      %s31 = sphi 0, %s28
      %s47 = sphi 0, %s49
      %s50 = sphi 0, %s47
      %s51 = sphi 0, %s50
      %s67 = sphi 0, %s51
      %s75 = sphi 0, %s77
      %s78 = sphi 0, %s75
      %s79 = sphi 0, %s78
      %s95 = sphi 0, %s79
      %s101 = sphi 0, %s103
      %s104 = sphi 0, %s101
      %s105 = sphi 0, %s104
      %s121 = sphi 0, %s105
      %s129 = sphi 0, %s131
      %s132 = sphi 0, %s129
      %s133 = sphi 0, %s132
      %s149 = sphi 0, %s133
    $region4: #{tpu_custom_call.1} parent=1 // loop_header_branch
      %19 = sbr.rel (%p17) target = $region8
    $region5: #{tpu_custom_call.1} parent=1 // loop_body
      %s21 = ssub.s32 %s16, 1
      %s22 = ssub.s32 %s16, 2
      %s32 = sadd.s32 1, %s25
      %p33 = scmp.ge.s32.totalorder %s32, 1
      %s34 = scalar_select %p33, 0, %s32
      %s35 = sadd.s32 1, %s24
      %s36 = scalar_select %p33, %s35, %s24
      %p37 = scmp.ge.s32.totalorder %s36, 1
      %s38 = scalar_select %p37, 0, %s36
      %s39 = sadd.s32 1, %s23
      %s40 = scalar_select %p37, %s39, %s23
      %p41 = scmp.ge.s32.totalorder %s40, 2
      %s42 = scalar_select %p41, 0, %s40
      %s43 = ssub.s32 %s23, %s42
      %s44 = ssub.s32 %s25, %s34
      %s45 = sor.u32 %s43, %s44
      %p46 = scmp.eq.s32.totalorder %s45, 0
      %s48 = sadd.s32 %s47, 1
      %s49 = scalar_select %p46, %s47, %s48
      %p52 = pneg %p46
      %p53 = scmp.eq.s32.totalorder %s16, 1
      %p54 = por %p52, %p53
      %p55 = scmp.ne.s32.totalorder %s47, %s50
      %p56 = scmp.eq.s32.totalorder %s16, 0
      %p57 = por %p55, %p56
      %p58 = scmp.ne.s32.totalorder %s47, %s50
      %p59 = scmp.eq.s32.totalorder %s21, 1
      %p60 = por %p58, %p59
      %p61 = scmp.ne.s32.totalorder %s50, %s51
      %p62 = scmp.eq.s32.totalorder %s21, 0
      %p63 = por %p61, %p62
      %p64 = scmp.ne.s32.totalorder %s50, %s51
      %p65 = scmp.eq.s32.totalorder %s22, 1
      %p66 = por %p64, %p65
      %p68 = scmp.ne.s32.totalorder %s51, %s67
      %p69 = scmp.eq.s32.totalorder %s22, 0
      %p70 = por %p68, %p69
      %s71 = ssub.s32 %s25, %s34
      %s72 = ssub.s32 %s24, %s38
      %s73 = sor.u32 %s71, %s72
      %p74 = scmp.eq.s32.totalorder %s73, 0
      %s76 = sadd.s32 %s75, 1
      %s77 = scalar_select %p74, %s75, %s76
      %p80 = pneg %p74
      %p81 = scmp.eq.s32.totalorder %s16, 1
      %p82 = por %p80, %p81
      %p83 = scmp.ne.s32.totalorder %s75, %s78
      %p84 = scmp.eq.s32.totalorder %s16, 0
      %p85 = por %p83, %p84
      %p86 = scmp.ne.s32.totalorder %s75, %s78
      %p87 = scmp.eq.s32.totalorder %s21, 1
      %p88 = por %p86, %p87
      %p89 = scmp.ne.s32.totalorder %s78, %s79
      %p90 = scmp.eq.s32.totalorder %s21, 0
      %p91 = por %p89, %p90
      %p92 = scmp.ne.s32.totalorder %s78, %s79
      %p93 = scmp.eq.s32.totalorder %s22, 1
      %p94 = por %p92, %p93
      %p96 = scmp.ne.s32.totalorder %s79, %s95
      %p97 = scmp.eq.s32.totalorder %s22, 0
      %p98 = por %p96, %p97
      %s99 = ssub.s32 %s24, %s38
      %p100 = scmp.eq.s32.totalorder %s99, 0
      %s102 = sadd.s32 %s101, 1
      %s103 = scalar_select %p100, %s101, %s102
      %p106 = pneg %p100
      %p107 = scmp.eq.s32.totalorder %s16, 1
      %p108 = por %p106, %p107
      %p109 = scmp.ne.s32.totalorder %s101, %s104
      %p110 = scmp.eq.s32.totalorder %s16, 0
      %p111 = por %p109, %p110
      %p112 = scmp.ne.s32.totalorder %s101, %s104
      %p113 = scmp.eq.s32.totalorder %s21, 1
      %p114 = por %p112, %p113
      %p115 = scmp.ne.s32.totalorder %s104, %s105
      %p116 = scmp.eq.s32.totalorder %s21, 0
      %p117 = por %p115, %p116
      %p118 = scmp.ne.s32.totalorder %s104, %s105
      %p119 = scmp.eq.s32.totalorder %s22, 1
      %p120 = por %p118, %p119
      %p122 = scmp.ne.s32.totalorder %s105, %s121
      %p123 = scmp.eq.s32.totalorder %s22, 0
      %p124 = por %p122, %p123
      %s125 = ssub.s32 %s23, %s42
      %s126 = ssub.s32 %s24, %s38
      %s127 = sor.u32 %s125, %s126
      %p128 = scmp.eq.s32.totalorder %s127, 0
      %s130 = sadd.s32 %s129, 1
      %s131 = scalar_select %p128, %s129, %s130
      %p134 = pneg %p128
      %p135 = scmp.eq.s32.totalorder %s16, 1
      %p136 = por %p134, %p135
      %p137 = scmp.ne.s32.totalorder %s129, %s132
      %p138 = scmp.eq.s32.totalorder %s16, 0
      %p139 = por %p137, %p138
      %p140 = scmp.ne.s32.totalorder %s129, %s132
      %p141 = scmp.eq.s32.totalorder %s21, 1
      %p142 = por %p140, %p141
      %p143 = scmp.ne.s32.totalorder %s132, %s133
      %p144 = scmp.eq.s32.totalorder %s21, 0
      %p145 = por %p143, %p144
      %p146 = scmp.ne.s32.totalorder %s132, %s133
      %p147 = scmp.eq.s32.totalorder %s22, 1
      %p148 = por %p146, %p147
      %p150 = scmp.ne.s32.totalorder %s133, %s149
      %p151 = scmp.eq.s32.totalorder %s22, 0
      %p152 = por %p150, %p151
      %p153 = scmp.le.s32.totalorder 1, %s16
      %p154 = scmp.lt.s32.totalorder %s16, 3
      %p155 = pnand %p153, %p154
      %p156 = pneg %p155
      // Predicated region
      $region9: #{tpu_custom_call.1} parent=5 // pred_check
        _
      $region10: #{tpu_custom_call.1} parent=5 // pred_check_branch
        %158 = sbr.rel (%p155) target = $region12
      $region11: #{tpu_custom_call.1} parent=5 // pred_region
        %s159 = ssub.s32 %s16, 1
        // Predicated region
        $region13: #{tpu_custom_call.1} parent=11 // pred_check
          %p160 = pneg %p91
        $region14: #{tpu_custom_call.1} parent=11 // pred_check_branch
          %162 = sbr.rel (%p160) target = $region16
        $region15: #{tpu_custom_call.1} parent=11 // pred_region
          %s163 = smul.u32 32, %s28
          %s165 = ssub.s32 2048, 2048
          %166 = vsyncadd [#allocation7], %s165
          %s167 = sadd.s32 %s27, %s163
          %s168 = smul.addr %s167, 64
          %s169 = scalar_lea.hbm %s1, %s168
          %s170 = sshll.u32 [#allocation6], 4
          %s171 = int_to_ptr.vmem [resolvable:$true] %s170
          %176 = dma.hbm_to_vmem [thread:$0]  %s169, 2048, %s171, [#allocation7], 64, 64, 4
        $region16: #{tpu_custom_call.1} parent=11 // pred_fallthru
          _
        // Predicated region
        $region17: #{tpu_custom_call.1} parent=11 // pred_check
          %p177 = pneg %p117
        $region18: #{tpu_custom_call.1} parent=11 // pred_check_branch
          %179 = sbr.rel (%p177) target = $region20
        $region19: #{tpu_custom_call.1} parent=11 // pred_region
          %p180 = scmp.lt.s32.totalorder %s27, 0
          %s181 = scalar_select %p180, %s27, 0
          %s182 = smul.addr %s181, 2
          %s183 = scalar_lea.vmem %s2, %s182
        $region20: #{tpu_custom_call.1} parent=11 // pred_fallthru
          _
      $region12: #{tpu_custom_call.1} parent=5 // pred_fallthru
        _
      %p184 = scmp.lt.s32.totalorder %s16, 2
      // Predicated region
      $region21: #{tpu_custom_call.1} parent=5 // pred_check
        %p185 = pneg %p184
      $region22: #{tpu_custom_call.1} parent=5 // pred_check_branch
        %187 = sbr.rel (%p185) target = $region24
      $region23: #{tpu_custom_call.1} parent=5 // pred_region
        // Predicated region
        $region25: #{tpu_custom_call.1} parent=23 // pred_check
          %p188 = pneg %p57
        $region26: #{tpu_custom_call.1} parent=23 // pred_check_branch
          %190 = sbr.rel (%p188) target = $region28
        $region27: #{tpu_custom_call.1} parent=23 // pred_region
          %s191 = sand.u32 %s47, 1
          %s192 = scalar_lea.sflag [#allocation4], %s191
          %s193 = sand.u32 %s47, 1
          %s194 = smul.addr %s193, 512
          %s195 = scalar_lea.vmem [#allocation3], %s194
          %s196 = smul.u32 64, %s23
          %s197 = smul.u32 2, %s25
          %s199 = ssub.s32 8192, 8192
          %200 = vsyncadd %s192, %s199
          %s201 = smul.addr %s196, 2
          %s202 = sadd.s32 %s197, %s201
          %s203 = smul.addr %s202, 64
          %s204 = scalar_lea.hbm %s0, %s203
          %s205 = sshll.u32 %s195, 4
          %s206 = int_to_ptr.vmem [resolvable:$true] %s205
          %211 = dma.hbm_to_vmem [thread:$0]  %s204, 8192, %s206, %s192, 128, 128, 8
        $region28: #{tpu_custom_call.1} parent=23 // pred_fallthru
          _
      $region24: #{tpu_custom_call.1} parent=5 // pred_fallthru
        _
      %p212 = scmp.le.s32.totalorder 1, %s16
      %p213 = scmp.lt.s32.totalorder %s16, 3
      %p214 = pnand %p212, %p213
      %p215 = pneg %p214
      // Predicated region
      $region29: #{tpu_custom_call.1} parent=5 // pred_check
        _
      $region30: #{tpu_custom_call.1} parent=5 // pred_check_branch
        %217 = sbr.rel (%p214) target = $region32
      $region31: #{tpu_custom_call.1} parent=5 // pred_region
        %s218 = ssub.s32 %s16, 1
        %s219 = sand.u32 %s50, 1
        %s220 = scalar_lea.sflag [#allocation4], %s219
        %s221 = sand.u32 %s50, 1
        %s222 = smul.addr %s221, 512
        %s223 = scalar_lea.vmem [#allocation3], %s222
        // Predicated region
        $region33: #{tpu_custom_call.1} parent=31 // pred_check
          %p224 = pneg %p63
        $region34: #{tpu_custom_call.1} parent=31 // pred_check_branch
          %226 = sbr.rel (%p224) target = $region36
        $region35: #{tpu_custom_call.1} parent=31 // pred_region
          %227 = dma.done %s220, 8192
        $region36: #{tpu_custom_call.1} parent=31 // pred_fallthru
          _
        // Predicated region
        $region37: #{tpu_custom_call.1} parent=31 // pred_check
          %p228 = pneg %p91
        $region38: #{tpu_custom_call.1} parent=31 // pred_check_branch
          %230 = sbr.rel (%p228) target = $region40
        $region39: #{tpu_custom_call.1} parent=31 // pred_region
          %231 = dma.done [#allocation7], 2048
        $region40: #{tpu_custom_call.1} parent=31 // pred_fallthru
          _
        %s232 = sand.u32 %s50, 1
        %s233 = scalar_lea.sflag [#allocation4], %s232
        %s234 = sand.u32 %s50, 1
        %s235 = smul.addr %s234, 512
        %s236 = scalar_lea.vmem [#allocation3], %s235
        %p237 = pneg %p63
        %p238 = pneg %p60
        %p239 = pneg %p91
        %p240 = pneg %p88
        %p241 = scmp.lt.s32.totalorder %s27, 0
        %s242 = scalar_select %p241, %s27, 0
        %s243 = smul.addr %s242, 2
        %s244 = scalar_lea.vmem %s2, %s243
        %p245 = pneg %p117
        %p246 = pneg %p114
        %p247 = pneg %p145
        %p248 = pneg %p142
        %s249 = sand.u32 %s132, 1
        %s250 = scalar_lea.sflag [#allocation5], %s249
        %s251 = sand.u32 %s132, 1
        %s252 = smul.addr %s251, 256
        %s253 = scalar_lea.vmem [#allocation8], %s252
        %s254 = smul.u32 64, %s26
        %s255 = smul.u32 2, %s28
        %s256 = smul.u32 32, %s28
        %p257 = scmp.lt.s32.totalorder %s27, 0
        %s258 = scalar_select %p257, %s27, 0
        %s259 = smul.addr %s258, 2
        %s260 = scalar_lea.vmem %s2, %s259
        %s261 = smul.u32 64, %s26
        %p263 = scmp.eq.s32.totalorder %s28, 0
        // Predicated region
        $region41: #{tpu_custom_call.1} parent=31 // pred_check
          %p264 = pneg %p263
        $region42: #{tpu_custom_call.1} parent=31 // pred_check_branch
          %266 = sbr.rel (%p264) target = $region44
        $region43: #{tpu_custom_call.1} parent=31 // pred_region
          %267 = vst [vmem:[#allocation2] sm:$0xff] 0.0
          %268 = vst [vmem:[#allocation2 + $0x8] sm:$0xff] 0.0
          %269 = vst [vmem:[#allocation2 + $0x10] sm:$0xff] 0.0
          %270 = vst [vmem:[#allocation2 + $0x18] sm:$0xff] 0.0
          %271 = vst [vmem:[#allocation2 + $0x20] sm:$0xff] 0.0
          %272 = vst [vmem:[#allocation2 + $0x28] sm:$0xff] 0.0
          %273 = vst [vmem:[#allocation2 + $0x30] sm:$0xff] 0.0
          %274 = vst [vmem:[#allocation2 + $0x38] sm:$0xff] 0.0
          %275 = vst [vmem:[#allocation2 + $0x40] sm:$0xff] 0.0
          %276 = vst [vmem:[#allocation2 + $0x48] sm:$0xff] 0.0
          %277 = vst [vmem:[#allocation2 + $0x50] sm:$0xff] 0.0
          %278 = vst [vmem:[#allocation2 + $0x58] sm:$0xff] 0.0
          %279 = vst [vmem:[#allocation2 + $0x60] sm:$0xff] 0.0
          %280 = vst [vmem:[#allocation2 + $0x68] sm:$0xff] 0.0
          %281 = vst [vmem:[#allocation2 + $0x70] sm:$0xff] 0.0
          %282 = vst [vmem:[#allocation2 + $0x78] sm:$0xff] 0.0
          %283 = vst [vmem:[#allocation2 + $0x80] sm:$0xff] 0.0
          %284 = vst [vmem:[#allocation2 + $0x88] sm:$0xff] 0.0
          %285 = vst [vmem:[#allocation2 + $0x90] sm:$0xff] 0.0
          %286 = vst [vmem:[#allocation2 + $0x98] sm:$0xff] 0.0
          %287 = vst [vmem:[#allocation2 + $0xa0] sm:$0xff] 0.0
          %288 = vst [vmem:[#allocation2 + $0xa8] sm:$0xff] 0.0
          %289 = vst [vmem:[#allocation2 + $0xb0] sm:$0xff] 0.0
          %290 = vst [vmem:[#allocation2 + $0xb8] sm:$0xff] 0.0
          %291 = vst [vmem:[#allocation2 + $0xc0] sm:$0xff] 0.0
          %292 = vst [vmem:[#allocation2 + $0xc8] sm:$0xff] 0.0
          %293 = vst [vmem:[#allocation2 + $0xd0] sm:$0xff] 0.0
          %294 = vst [vmem:[#allocation2 + $0xd8] sm:$0xff] 0.0
          %295 = vst [vmem:[#allocation2 + $0xe0] sm:$0xff] 0.0
          %296 = vst [vmem:[#allocation2 + $0xe8] sm:$0xff] 0.0
          %297 = vst [vmem:[#allocation2 + $0xf0] sm:$0xff] 0.0
          %298 = vst [vmem:[#allocation2 + $0xf8] sm:$0xff] 0.0
          %299 = vst [vmem:[#allocation2 + $0x100] sm:$0xff] 0.0
          %300 = vst [vmem:[#allocation2 + $0x108] sm:$0xff] 0.0
          %301 = vst [vmem:[#allocation2 + $0x110] sm:$0xff] 0.0
          %302 = vst [vmem:[#allocation2 + $0x118] sm:$0xff] 0.0
          %303 = vst [vmem:[#allocation2 + $0x120] sm:$0xff] 0.0
          %304 = vst [vmem:[#allocation2 + $0x128] sm:$0xff] 0.0
          %305 = vst [vmem:[#allocation2 + $0x130] sm:$0xff] 0.0
          %306 = vst [vmem:[#allocation2 + $0x138] sm:$0xff] 0.0
          %307 = vst [vmem:[#allocation2 + $0x140] sm:$0xff] 0.0
          %308 = vst [vmem:[#allocation2 + $0x148] sm:$0xff] 0.0
          %309 = vst [vmem:[#allocation2 + $0x150] sm:$0xff] 0.0
          %310 = vst [vmem:[#allocation2 + $0x158] sm:$0xff] 0.0
          %311 = vst [vmem:[#allocation2 + $0x160] sm:$0xff] 0.0
          %312 = vst [vmem:[#allocation2 + $0x168] sm:$0xff] 0.0
          %313 = vst [vmem:[#allocation2 + $0x170] sm:$0xff] 0.0
          %314 = vst [vmem:[#allocation2 + $0x178] sm:$0xff] 0.0
          %315 = vst [vmem:[#allocation2 + $0x180] sm:$0xff] 0.0
          %316 = vst [vmem:[#allocation2 + $0x188] sm:$0xff] 0.0
          %317 = vst [vmem:[#allocation2 + $0x190] sm:$0xff] 0.0
          %318 = vst [vmem:[#allocation2 + $0x198] sm:$0xff] 0.0
          %319 = vst [vmem:[#allocation2 + $0x1a0] sm:$0xff] 0.0
          %320 = vst [vmem:[#allocation2 + $0x1a8] sm:$0xff] 0.0
          %321 = vst [vmem:[#allocation2 + $0x1b0] sm:$0xff] 0.0
          %322 = vst [vmem:[#allocation2 + $0x1b8] sm:$0xff] 0.0
          %323 = vst [vmem:[#allocation2 + $0x1c0] sm:$0xff] 0.0
          %324 = vst [vmem:[#allocation2 + $0x1c8] sm:$0xff] 0.0
          %325 = vst [vmem:[#allocation2 + $0x1d0] sm:$0xff] 0.0
          %326 = vst [vmem:[#allocation2 + $0x1d8] sm:$0xff] 0.0
          %327 = vst [vmem:[#allocation2 + $0x1e0] sm:$0xff] 0.0
          %328 = vst [vmem:[#allocation2 + $0x1e8] sm:$0xff] 0.0
          %329 = vst [vmem:[#allocation2 + $0x1f0] sm:$0xff] 0.0
          %330 = vst [vmem:[#allocation2 + $0x1f8] sm:$0xff] 0.0
        $region44: #{tpu_custom_call.1} parent=31 // pred_fallthru
          _
        %v331 = vld [vmem:[#allocation2] sm:$0xff]
        %v332 = vld [vmem:[#allocation2 + $0x8] sm:$0xff]
        %v333 = vld [vmem:[#allocation2 + $0x10] sm:$0xff]
        %v334 = vld [vmem:[#allocation2 + $0x18] sm:$0xff]
        %v335 = vld [vmem:[#allocation2 + $0x20] sm:$0xff]
        %v336 = vld [vmem:[#allocation2 + $0x28] sm:$0xff]
        %v337 = vld [vmem:[#allocation2 + $0x30] sm:$0xff]
        %v338 = vld [vmem:[#allocation2 + $0x38] sm:$0xff]
        %v339 = vld [vmem:[#allocation2 + $0x40] sm:$0xff]
        %v340 = vld [vmem:[#allocation2 + $0x48] sm:$0xff]
        %v341 = vld [vmem:[#allocation2 + $0x50] sm:$0xff]
        %v342 = vld [vmem:[#allocation2 + $0x58] sm:$0xff]
        %v343 = vld [vmem:[#allocation2 + $0x60] sm:$0xff]
        %v344 = vld [vmem:[#allocation2 + $0x68] sm:$0xff]
        %v345 = vld [vmem:[#allocation2 + $0x70] sm:$0xff]
        %v346 = vld [vmem:[#allocation2 + $0x78] sm:$0xff]
        %v347 = vld [vmem:[#allocation2 + $0x80] sm:$0xff]
        %v348 = vld [vmem:[#allocation2 + $0x88] sm:$0xff]
        %v349 = vld [vmem:[#allocation2 + $0x90] sm:$0xff]
        %v350 = vld [vmem:[#allocation2 + $0x98] sm:$0xff]
        %v351 = vld [vmem:[#allocation2 + $0xa0] sm:$0xff]
        %v352 = vld [vmem:[#allocation2 + $0xa8] sm:$0xff]
        %v353 = vld [vmem:[#allocation2 + $0xb0] sm:$0xff]
        %v354 = vld [vmem:[#allocation2 + $0xb8] sm:$0xff]
        %v355 = vld [vmem:[#allocation2 + $0xc0] sm:$0xff]
        %v356 = vld [vmem:[#allocation2 + $0xc8] sm:$0xff]
        %v357 = vld [vmem:[#allocation2 + $0xd0] sm:$0xff]
        %v358 = vld [vmem:[#allocation2 + $0xd8] sm:$0xff]
        %v359 = vld [vmem:[#allocation2 + $0xe0] sm:$0xff]
        %v360 = vld [vmem:[#allocation2 + $0xe8] sm:$0xff]
        %v361 = vld [vmem:[#allocation2 + $0xf0] sm:$0xff]
        %v362 = vld [vmem:[#allocation2 + $0xf8] sm:$0xff]
        %v363 = vld [vmem:[#allocation2 + $0x100] sm:$0xff]
        %v364 = vld [vmem:[#allocation2 + $0x108] sm:$0xff]
        %v365 = vld [vmem:[#allocation2 + $0x110] sm:$0xff]
        %v366 = vld [vmem:[#allocation2 + $0x118] sm:$0xff]
        %v367 = vld [vmem:[#allocation2 + $0x120] sm:$0xff]
        %v368 = vld [vmem:[#allocation2 + $0x128] sm:$0xff]
        %v369 = vld [vmem:[#allocation2 + $0x130] sm:$0xff]
        %v370 = vld [vmem:[#allocation2 + $0x138] sm:$0xff]
        %v371 = vld [vmem:[#allocation2 + $0x140] sm:$0xff]
        %v372 = vld [vmem:[#allocation2 + $0x148] sm:$0xff]
        %v373 = vld [vmem:[#allocation2 + $0x150] sm:$0xff]
        %v374 = vld [vmem:[#allocation2 + $0x158] sm:$0xff]
        %v375 = vld [vmem:[#allocation2 + $0x160] sm:$0xff]
        %v376 = vld [vmem:[#allocation2 + $0x168] sm:$0xff]
        %v377 = vld [vmem:[#allocation2 + $0x170] sm:$0xff]
        %v378 = vld [vmem:[#allocation2 + $0x178] sm:$0xff]
        %v379 = vld [vmem:[#allocation2 + $0x180] sm:$0xff]
        %v380 = vld [vmem:[#allocation2 + $0x188] sm:$0xff]
        %v381 = vld [vmem:[#allocation2 + $0x190] sm:$0xff]
        %v382 = vld [vmem:[#allocation2 + $0x198] sm:$0xff]
        %v383 = vld [vmem:[#allocation2 + $0x1a0] sm:$0xff]
        %v384 = vld [vmem:[#allocation2 + $0x1a8] sm:$0xff]
        %v385 = vld [vmem:[#allocation2 + $0x1b0] sm:$0xff]
        %v386 = vld [vmem:[#allocation2 + $0x1b8] sm:$0xff]
        %v387 = vld [vmem:[#allocation2 + $0x1c0] sm:$0xff]
        %v388 = vld [vmem:[#allocation2 + $0x1c8] sm:$0xff]
        %v389 = vld [vmem:[#allocation2 + $0x1d0] sm:$0xff]
        %v390 = vld [vmem:[#allocation2 + $0x1d8] sm:$0xff]
        %v391 = vld [vmem:[#allocation2 + $0x1e0] sm:$0xff]
        %v392 = vld [vmem:[#allocation2 + $0x1e8] sm:$0xff]
        %v393 = vld [vmem:[#allocation2 + $0x1f0] sm:$0xff]
        %v394 = vld [vmem:[#allocation2 + $0x1f8] sm:$0xff]
        %v395 = vld [vmem:[%s223] sm:$0xff]
        %v396 = vld [vmem:[%s223 + $0x8] sm:$0xff]
        %v397 = vld [vmem:[%s223 + $0x10] sm:$0xff]
        %v398 = vld [vmem:[%s223 + $0x18] sm:$0xff]
        %v399 = vld [vmem:[%s223 + $0x20] sm:$0xff]
        %v400 = vld [vmem:[%s223 + $0x28] sm:$0xff]
        %v401 = vld [vmem:[%s223 + $0x30] sm:$0xff]
        %v402 = vld [vmem:[%s223 + $0x38] sm:$0xff]
        %v403 = vld [vmem:[%s223 + $0x40] sm:$0xff]
        %v404 = vld [vmem:[%s223 + $0x48] sm:$0xff]
        %v405 = vld [vmem:[%s223 + $0x50] sm:$0xff]
        %v406 = vld [vmem:[%s223 + $0x58] sm:$0xff]
        %v407 = vld [vmem:[%s223 + $0x60] sm:$0xff]
        %v408 = vld [vmem:[%s223 + $0x68] sm:$0xff]
        %v409 = vld [vmem:[%s223 + $0x70] sm:$0xff]
        %v410 = vld [vmem:[%s223 + $0x78] sm:$0xff]
        %v411 = vld [vmem:[%s223 + $0x80] sm:$0xff]
        %v412 = vld [vmem:[%s223 + $0x88] sm:$0xff]
        %v413 = vld [vmem:[%s223 + $0x90] sm:$0xff]
        %v414 = vld [vmem:[%s223 + $0x98] sm:$0xff]
        %v415 = vld [vmem:[%s223 + $0xa0] sm:$0xff]
        %v416 = vld [vmem:[%s223 + $0xa8] sm:$0xff]
        %v417 = vld [vmem:[%s223 + $0xb0] sm:$0xff]
        %v418 = vld [vmem:[%s223 + $0xb8] sm:$0xff]
        %v419 = vld [vmem:[%s223 + $0xc0] sm:$0xff]
        %v420 = vld [vmem:[%s223 + $0xc8] sm:$0xff]
        %v421 = vld [vmem:[%s223 + $0xd0] sm:$0xff]
        %v422 = vld [vmem:[%s223 + $0xd8] sm:$0xff]
        %v423 = vld [vmem:[%s223 + $0xe0] sm:$0xff]
        %v424 = vld [vmem:[%s223 + $0xe8] sm:$0xff]
        %v425 = vld [vmem:[%s223 + $0xf0] sm:$0xff]
        %v426 = vld [vmem:[%s223 + $0xf8] sm:$0xff]
        %v427 = vld [vmem:[%s223 + $0x100] sm:$0xff]
        %v428 = vld [vmem:[%s223 + $0x108] sm:$0xff]
        %v429 = vld [vmem:[%s223 + $0x110] sm:$0xff]
        %v430 = vld [vmem:[%s223 + $0x118] sm:$0xff]
        %v431 = vld [vmem:[%s223 + $0x120] sm:$0xff]
        %v432 = vld [vmem:[%s223 + $0x128] sm:$0xff]
        %v433 = vld [vmem:[%s223 + $0x130] sm:$0xff]
        %v434 = vld [vmem:[%s223 + $0x138] sm:$0xff]
        %v435 = vld [vmem:[%s223 + $0x140] sm:$0xff]
        %v436 = vld [vmem:[%s223 + $0x148] sm:$0xff]
        %v437 = vld [vmem:[%s223 + $0x150] sm:$0xff]
        %v438 = vld [vmem:[%s223 + $0x158] sm:$0xff]
        %v439 = vld [vmem:[%s223 + $0x160] sm:$0xff]
        %v440 = vld [vmem:[%s223 + $0x168] sm:$0xff]
        %v441 = vld [vmem:[%s223 + $0x170] sm:$0xff]
        %v442 = vld [vmem:[%s223 + $0x178] sm:$0xff]
        %v443 = vld [vmem:[%s223 + $0x180] sm:$0xff]
        %v444 = vld [vmem:[%s223 + $0x188] sm:$0xff]
        %v445 = vld [vmem:[%s223 + $0x190] sm:$0xff]
        %v446 = vld [vmem:[%s223 + $0x198] sm:$0xff]
        %v447 = vld [vmem:[%s223 + $0x1a0] sm:$0xff]
        %v448 = vld [vmem:[%s223 + $0x1a8] sm:$0xff]
        %v449 = vld [vmem:[%s223 + $0x1b0] sm:$0xff]
        %v450 = vld [vmem:[%s223 + $0x1b8] sm:$0xff]
        %v451 = vld [vmem:[%s223 + $0x1c0] sm:$0xff]
        %v452 = vld [vmem:[%s223 + $0x1c8] sm:$0xff]
        %v453 = vld [vmem:[%s223 + $0x1d0] sm:$0xff]
        %v454 = vld [vmem:[%s223 + $0x1d8] sm:$0xff]
        %v455 = vld [vmem:[%s223 + $0x1e0] sm:$0xff]
        %v456 = vld [vmem:[%s223 + $0x1e8] sm:$0xff]
        %v457 = vld [vmem:[%s223 + $0x1f0] sm:$0xff]
        %v458 = vld [vmem:[%s223 + $0x1f8] sm:$0xff]
        %v459 = vld [vmem:[#allocation6] sm:$0xf]
        %v460 = vld [vmem:[#allocation6 + $0x4] sm:$0xf]
        %v461 = vld [vmem:[#allocation6 + $0x8] sm:$0xf]
        %v462 = vld [vmem:[#allocation6 + $0xc] sm:$0xf]
        %v463 = vld [vmem:[#allocation6 + $0x10] sm:$0xf]
        %v464 = vld [vmem:[#allocation6 + $0x14] sm:$0xf]
        %v465 = vld [vmem:[#allocation6 + $0x18] sm:$0xf]
        %v466 = vld [vmem:[#allocation6 + $0x1c] sm:$0xf]
        %v467 = vld [vmem:[#allocation6 + $0x20] sm:$0xf]
        %v468 = vld [vmem:[#allocation6 + $0x24] sm:$0xf]
        %v469 = vld [vmem:[#allocation6 + $0x28] sm:$0xf]
        %v470 = vld [vmem:[#allocation6 + $0x2c] sm:$0xf]
        %v471 = vld [vmem:[#allocation6 + $0x30] sm:$0xf]
        %v472 = vld [vmem:[#allocation6 + $0x34] sm:$0xf]
        %v473 = vld [vmem:[#allocation6 + $0x38] sm:$0xf]
        %v474 = vld [vmem:[#allocation6 + $0x3c] sm:$0xf]
        %v475 = vld [vmem:[#allocation6 + $0x40] sm:$0xf]
        %v476 = vld [vmem:[#allocation6 + $0x44] sm:$0xf]
        %v477 = vld [vmem:[#allocation6 + $0x48] sm:$0xf]
        %v478 = vld [vmem:[#allocation6 + $0x4c] sm:$0xf]
        %v479 = vld [vmem:[#allocation6 + $0x50] sm:$0xf]
        %v480 = vld [vmem:[#allocation6 + $0x54] sm:$0xf]
        %v481 = vld [vmem:[#allocation6 + $0x58] sm:$0xf]
        %v482 = vld [vmem:[#allocation6 + $0x5c] sm:$0xf]
        %v483 = vld [vmem:[#allocation6 + $0x60] sm:$0xf]
        %v484 = vld [vmem:[#allocation6 + $0x64] sm:$0xf]
        %v485 = vld [vmem:[#allocation6 + $0x68] sm:$0xf]
        %v486 = vld [vmem:[#allocation6 + $0x6c] sm:$0xf]
        %v487 = vld [vmem:[#allocation6 + $0x70] sm:$0xf]
        %v488 = vld [vmem:[#allocation6 + $0x74] sm:$0xf]
        %v489 = vld [vmem:[#allocation6 + $0x78] sm:$0xf]
        %v490 = vld [vmem:[#allocation6 + $0x7c] sm:$0xf]
        %v555 = vunpack.c.l.b16 %v395
        %v556 = vunpack.c.h.b16 %v395
        %v557 = vunpack.c.l.b16 %v396
        %v558 = vunpack.c.h.b16 %v396
        %v559 = vunpack.c.l.b16 %v397
        %v560 = vunpack.c.h.b16 %v397
        %v561 = vunpack.c.l.b16 %v398
        %v562 = vunpack.c.h.b16 %v398
        %v563 = vunpack.c.l.b16 %v399
        %v564 = vunpack.c.h.b16 %v399
        %v565 = vunpack.c.l.b16 %v400
        %v566 = vunpack.c.h.b16 %v400
        %v567 = vunpack.c.l.b16 %v401
        %v568 = vunpack.c.h.b16 %v401
        %v569 = vunpack.c.l.b16 %v402
        %v570 = vunpack.c.h.b16 %v402
        %v571 = vunpack.c.l.b16 %v403
        %v572 = vunpack.c.h.b16 %v403
        %v573 = vunpack.c.l.b16 %v404
        %v574 = vunpack.c.h.b16 %v404
        %v575 = vunpack.c.l.b16 %v405
        %v576 = vunpack.c.h.b16 %v405
        %v577 = vunpack.c.l.b16 %v406
        %v578 = vunpack.c.h.b16 %v406
        %v579 = vunpack.c.l.b16 %v407
        %v580 = vunpack.c.h.b16 %v407
        %v581 = vunpack.c.l.b16 %v408
        %v582 = vunpack.c.h.b16 %v408
        %v583 = vunpack.c.l.b16 %v409
        %v584 = vunpack.c.h.b16 %v409
        %v585 = vunpack.c.l.b16 %v410
        %v586 = vunpack.c.h.b16 %v410
        %v587 = vunpack.c.l.b16 %v411
        %v588 = vunpack.c.h.b16 %v411
        %v589 = vunpack.c.l.b16 %v412
        %v590 = vunpack.c.h.b16 %v412
        %v591 = vunpack.c.l.b16 %v413
        %v592 = vunpack.c.h.b16 %v413
        %v593 = vunpack.c.l.b16 %v414
        %v594 = vunpack.c.h.b16 %v414
        %v595 = vunpack.c.l.b16 %v415
        %v596 = vunpack.c.h.b16 %v415
        %v597 = vunpack.c.l.b16 %v416
        %v598 = vunpack.c.h.b16 %v416
        %v599 = vunpack.c.l.b16 %v417
        %v600 = vunpack.c.h.b16 %v417
        %v601 = vunpack.c.l.b16 %v418
        %v602 = vunpack.c.h.b16 %v418
        %v603 = vunpack.c.l.b16 %v419
        %v604 = vunpack.c.h.b16 %v419
        %v605 = vunpack.c.l.b16 %v420
        %v606 = vunpack.c.h.b16 %v420
        %v607 = vunpack.c.l.b16 %v421
        %v608 = vunpack.c.h.b16 %v421
        %v609 = vunpack.c.l.b16 %v422
        %v610 = vunpack.c.h.b16 %v422
        %v611 = vunpack.c.l.b16 %v423
        %v612 = vunpack.c.h.b16 %v423
        %v613 = vunpack.c.l.b16 %v424
        %v614 = vunpack.c.h.b16 %v424
        %v615 = vunpack.c.l.b16 %v425
        %v616 = vunpack.c.h.b16 %v425
        %v617 = vunpack.c.l.b16 %v426
        %v618 = vunpack.c.h.b16 %v426
        %v619 = vunpack.c.l.b16 %v427
        %v620 = vunpack.c.h.b16 %v427
        %v621 = vunpack.c.l.b16 %v428
        %v622 = vunpack.c.h.b16 %v428
        %v623 = vunpack.c.l.b16 %v429
        %v624 = vunpack.c.h.b16 %v429
        %v625 = vunpack.c.l.b16 %v430
        %v626 = vunpack.c.h.b16 %v430
        %v627 = vunpack.c.l.b16 %v431
        %v628 = vunpack.c.h.b16 %v431
        %v629 = vunpack.c.l.b16 %v432
        %v630 = vunpack.c.h.b16 %v432
        %v631 = vunpack.c.l.b16 %v433
        %v632 = vunpack.c.h.b16 %v433
        %v633 = vunpack.c.l.b16 %v434
        %v634 = vunpack.c.h.b16 %v434
        %v635 = vunpack.c.l.b16 %v435
        %v636 = vunpack.c.h.b16 %v435
        %v637 = vunpack.c.l.b16 %v436
        %v638 = vunpack.c.h.b16 %v436
        %v639 = vunpack.c.l.b16 %v437
        %v640 = vunpack.c.h.b16 %v437
        %v641 = vunpack.c.l.b16 %v438
        %v642 = vunpack.c.h.b16 %v438
        %v643 = vunpack.c.l.b16 %v439
        %v644 = vunpack.c.h.b16 %v439
        %v645 = vunpack.c.l.b16 %v440
        %v646 = vunpack.c.h.b16 %v440
        %v647 = vunpack.c.l.b16 %v441
        %v648 = vunpack.c.h.b16 %v441
        %v649 = vunpack.c.l.b16 %v442
        %v650 = vunpack.c.h.b16 %v442
        %v651 = vunpack.c.l.b16 %v443
        %v652 = vunpack.c.h.b16 %v443
        %v653 = vunpack.c.l.b16 %v444
        %v654 = vunpack.c.h.b16 %v444
        %v655 = vunpack.c.l.b16 %v445
        %v656 = vunpack.c.h.b16 %v445
        %v657 = vunpack.c.l.b16 %v446
        %v658 = vunpack.c.h.b16 %v446
        %v659 = vunpack.c.l.b16 %v447
        %v660 = vunpack.c.h.b16 %v447
        %v661 = vunpack.c.l.b16 %v448
        %v662 = vunpack.c.h.b16 %v448
        %v663 = vunpack.c.l.b16 %v449
        %v664 = vunpack.c.h.b16 %v449
        %v665 = vunpack.c.l.b16 %v450
        %v666 = vunpack.c.h.b16 %v450
        %v667 = vunpack.c.l.b16 %v451
        %v668 = vunpack.c.h.b16 %v451
        %v669 = vunpack.c.l.b16 %v452
        %v670 = vunpack.c.h.b16 %v452
        %v671 = vunpack.c.l.b16 %v453
        %v672 = vunpack.c.h.b16 %v453
        %v673 = vunpack.c.l.b16 %v454
        %v674 = vunpack.c.h.b16 %v454
        %v675 = vunpack.c.l.b16 %v455
        %v676 = vunpack.c.h.b16 %v455
        %v677 = vunpack.c.l.b16 %v456
        %v678 = vunpack.c.h.b16 %v456
        %v679 = vunpack.c.l.b16 %v457
        %v680 = vunpack.c.h.b16 %v457
        %v681 = vunpack.c.l.b16 %v458
        %v682 = vunpack.c.h.b16 %v458
        %v683 = vpack.c.b16 %v557, %v555
        %v684 = vpack.c.b16 %v558, %v556
        %v685 = vpack.c.b16 %v561, %v559
        %v686 = vpack.c.b16 %v562, %v560
        %v687 = vpack.c.b16 %v565, %v563
        %v688 = vpack.c.b16 %v566, %v564
        %v689 = vpack.c.b16 %v569, %v567
        %v690 = vpack.c.b16 %v570, %v568
        %v691 = vpack.c.b16 %v573, %v571
        %v692 = vpack.c.b16 %v574, %v572
        %v693 = vpack.c.b16 %v577, %v575
        %v694 = vpack.c.b16 %v578, %v576
        %v695 = vpack.c.b16 %v581, %v579
        %v696 = vpack.c.b16 %v582, %v580
        %v697 = vpack.c.b16 %v585, %v583
        %v698 = vpack.c.b16 %v586, %v584
        %v699 = vpack.c.b16 %v589, %v587
        %v700 = vpack.c.b16 %v590, %v588
        %v701 = vpack.c.b16 %v593, %v591
        %v702 = vpack.c.b16 %v594, %v592
        %v703 = vpack.c.b16 %v597, %v595
        %v704 = vpack.c.b16 %v598, %v596
        %v705 = vpack.c.b16 %v601, %v599
        %v706 = vpack.c.b16 %v602, %v600
        %v707 = vpack.c.b16 %v605, %v603
        %v708 = vpack.c.b16 %v606, %v604
        %v709 = vpack.c.b16 %v609, %v607
        %v710 = vpack.c.b16 %v610, %v608
        %v711 = vpack.c.b16 %v613, %v611
        %v712 = vpack.c.b16 %v614, %v612
        %v713 = vpack.c.b16 %v617, %v615
        %v714 = vpack.c.b16 %v618, %v616
        %v715 = vpack.c.b16 %v621, %v619
        %v716 = vpack.c.b16 %v622, %v620
        %v717 = vpack.c.b16 %v625, %v623
        %v718 = vpack.c.b16 %v626, %v624
        %v719 = vpack.c.b16 %v629, %v627
        %v720 = vpack.c.b16 %v630, %v628
        %v721 = vpack.c.b16 %v633, %v631
        %v722 = vpack.c.b16 %v634, %v632
        %v723 = vpack.c.b16 %v637, %v635
        %v724 = vpack.c.b16 %v638, %v636
        %v725 = vpack.c.b16 %v641, %v639
        %v726 = vpack.c.b16 %v642, %v640
        %v727 = vpack.c.b16 %v645, %v643
        %v728 = vpack.c.b16 %v646, %v644
        %v729 = vpack.c.b16 %v649, %v647
        %v730 = vpack.c.b16 %v650, %v648
        %v731 = vpack.c.b16 %v653, %v651
        %v732 = vpack.c.b16 %v654, %v652
        %v733 = vpack.c.b16 %v657, %v655
        %v734 = vpack.c.b16 %v658, %v656
        %v735 = vpack.c.b16 %v661, %v659
        %v736 = vpack.c.b16 %v662, %v660
        %v737 = vpack.c.b16 %v665, %v663
        %v738 = vpack.c.b16 %v666, %v664
        %v739 = vpack.c.b16 %v669, %v667
        %v740 = vpack.c.b16 %v670, %v668
        %v741 = vpack.c.b16 %v673, %v671
        %v742 = vpack.c.b16 %v674, %v672
        %v743 = vpack.c.b16 %v677, %v675
        %v744 = vpack.c.b16 %v678, %v676
        %v745 = vpack.c.b16 %v681, %v679
        %v746 = vpack.c.b16 %v682, %v680
        %v843 = vunpack.c.l.b16 %v459
        %v844 = vunpack.c.l.b16 %v460
        %v845 = vunpack.c.l.b16 %v461
        %v846 = vunpack.c.l.b16 %v462
        %v847 = vunpack.c.l.b16 %v463
        %v848 = vunpack.c.l.b16 %v464
        %v849 = vunpack.c.l.b16 %v465
        %v850 = vunpack.c.l.b16 %v466
        %v851 = vunpack.c.l.b16 %v467
        %v852 = vunpack.c.l.b16 %v468
        %v853 = vunpack.c.l.b16 %v469
        %v854 = vunpack.c.l.b16 %v470
        %v855 = vunpack.c.l.b16 %v471
        %v856 = vunpack.c.l.b16 %v472
        %v857 = vunpack.c.l.b16 %v473
        %v858 = vunpack.c.l.b16 %v474
        %v859 = vunpack.c.l.b16 %v475
        %v860 = vunpack.c.l.b16 %v476
        %v861 = vunpack.c.l.b16 %v477
        %v862 = vunpack.c.l.b16 %v478
        %v863 = vunpack.c.l.b16 %v479
        %v864 = vunpack.c.l.b16 %v480
        %v865 = vunpack.c.l.b16 %v481
        %v866 = vunpack.c.l.b16 %v482
        %v867 = vunpack.c.l.b16 %v483
        %v868 = vunpack.c.l.b16 %v484
        %v869 = vunpack.c.l.b16 %v485
        %v870 = vunpack.c.l.b16 %v486
        %v871 = vunpack.c.l.b16 %v487
        %v872 = vunpack.c.l.b16 %v488
        %v873 = vunpack.c.l.b16 %v489
        %v874 = vunpack.c.l.b16 %v490
        %v875 = vpack.c.b16 %v844, %v843
        %v876 = vpack.c.b16 %v846, %v845
        %v877 = vpack.c.b16 %v848, %v847
        %v878 = vpack.c.b16 %v850, %v849
        %v879 = vpack.c.b16 %v852, %v851
        %v880 = vpack.c.b16 %v854, %v853
        %v881 = vpack.c.b16 %v856, %v855
        %v882 = vpack.c.b16 %v858, %v857
        %v883 = vpack.c.b16 %v860, %v859
        %v884 = vpack.c.b16 %v862, %v861
        %v885 = vpack.c.b16 %v864, %v863
        %v886 = vpack.c.b16 %v866, %v865
        %v887 = vpack.c.b16 %v868, %v867
        %v888 = vpack.c.b16 %v870, %v869
        %v889 = vpack.c.b16 %v872, %v871
        %v890 = vpack.c.b16 %v874, %v873
        %907 = vmatprep.subr.bf16.mxu0 0
        %908 = vmatpush1.bf16.msra.mxu0 %v882
        %909 = vmatprep.subr.bf16.mxu0 0
        %910 = vmatpush1.bf16.msra.mxu0 %v881
        %911 = vmatprep.subr.bf16.mxu0 0
        %912 = vmatpush1.bf16.msra.mxu0 %v880
        %913 = vmatprep.subr.bf16.mxu0 0
        %914 = vmatpush1.bf16.msra.mxu0 %v879
        %915 = vmatprep.subr.bf16.mxu0 0
        %916 = vmatpush1.bf16.msra.mxu0 %v878
        %917 = vmatprep.subr.bf16.mxu0 0
        %918 = vmatpush1.bf16.msra.mxu0 %v877
        %919 = vmatprep.subr.bf16.mxu0 0
        %920 = vmatpush1.bf16.msra.mxu0 %v876
        %921 = vmatprep.subr.bf16.mxu0 0
        %922 = vmatpush1.bf16.msra.mxu0 %v875
        %923 = vmatprep.subr.bf16.mxu0 0
        %924 = vmatpush2.bf16.msra.mxu0 %v890
        %925 = vmatprep.subr.bf16.mxu0 0
        %926 = vmatpush2.bf16.msra.mxu0 %v889
        %927 = vmatprep.subr.bf16.mxu0 0
        %928 = vmatpush2.bf16.msra.mxu0 %v888
        %929 = vmatprep.subr.bf16.mxu0 0
        %930 = vmatpush2.bf16.msra.mxu0 %v887
        %931 = vmatprep.subr.bf16.mxu0 0
        %932 = vmatpush2.bf16.msra.mxu0 %v886
        %933 = vmatprep.subr.bf16.mxu0 0
        %934 = vmatpush2.bf16.msra.mxu0 %v885
        %935 = vmatprep.subr.bf16.mxu0 0
        %936 = vmatpush2.bf16.msra.mxu0 %v884
        %937 = vmatprep.subr.bf16.mxu0 0
        %938 = vmatpush2.bf16.msra.mxu0 %v883
        %939 = vmatprep.mubr.bf16.mxu0 %v684
        %940 = vmatmul.mubr.bf16.gmra.mxu0 %v683
        %v941 = vpop.f32.mrf.mxu0
        %v942 = vadd.f32 0.0, %v941
        %v943 = vpop.f32.mrf.mxu0
        %v944 = vpop.f32.mrf.mxu0
        %v945 = vadd.f32 0.0, %v944
        %v946 = vpop.f32.mrf.mxu0
        %947 = vmatprep.mubr.bf16.mxu0 %v686
        %948 = vmatmul.mubr.bf16.gmra.mxu0 %v685
        %v949 = vpop.f32.mrf.mxu0
        %v950 = vadd.f32 0.0, %v949
        %v951 = vpop.f32.mrf.mxu0
        %v952 = vpop.f32.mrf.mxu0
        %v953 = vadd.f32 0.0, %v952
        %v954 = vpop.f32.mrf.mxu0
        %955 = vmatprep.mubr.bf16.mxu0 %v688
        %956 = vmatmul.mubr.bf16.gmra.mxu0 %v687
        %v957 = vpop.f32.mrf.mxu0
        %v958 = vadd.f32 0.0, %v957
        %v959 = vpop.f32.mrf.mxu0
        %v960 = vpop.f32.mrf.mxu0
        %v961 = vadd.f32 0.0, %v960
        %v962 = vpop.f32.mrf.mxu0
        %963 = vmatprep.mubr.bf16.mxu0 %v690
        %964 = vmatmul.mubr.bf16.gmra.mxu0 %v689
        %v965 = vpop.f32.mrf.mxu0
        %v966 = vadd.f32 0.0, %v965
        %v967 = vpop.f32.mrf.mxu0
        %v968 = vpop.f32.mrf.mxu0
        %v969 = vadd.f32 0.0, %v968
        %v970 = vpop.f32.mrf.mxu0
        %971 = vmatprep.mubr.bf16.mxu0 %v692
        %972 = vmatmul.mubr.bf16.gmra.mxu0 %v691
        %v973 = vpop.f32.mrf.mxu0
        %v974 = vadd.f32 0.0, %v973
        %v975 = vpop.f32.mrf.mxu0
        %v976 = vpop.f32.mrf.mxu0
        %v977 = vadd.f32 0.0, %v976
        %v978 = vpop.f32.mrf.mxu0
        %979 = vmatprep.mubr.bf16.mxu0 %v694
        %980 = vmatmul.mubr.bf16.gmra.mxu0 %v693
        %v981 = vpop.f32.mrf.mxu0
        %v982 = vadd.f32 0.0, %v981
        %v983 = vpop.f32.mrf.mxu0
        %v984 = vpop.f32.mrf.mxu0
        %v985 = vadd.f32 0.0, %v984
        %v986 = vpop.f32.mrf.mxu0
        %987 = vmatprep.mubr.bf16.mxu0 %v696
        %988 = vmatmul.mubr.bf16.gmra.mxu0 %v695
        %v989 = vpop.f32.mrf.mxu0
        %v990 = vadd.f32 0.0, %v989
        %v991 = vpop.f32.mrf.mxu0
        %v992 = vpop.f32.mrf.mxu0
        %v993 = vadd.f32 0.0, %v992
        %v994 = vpop.f32.mrf.mxu0
        %995 = vmatprep.mubr.bf16.mxu0 %v698
        %996 = vmatmul.mubr.bf16.gmra.mxu0 %v697
        %v997 = vpop.f32.mrf.mxu0
        %v998 = vadd.f32 0.0, %v997
        %v999 = vpop.f32.mrf.mxu0
        %v1000 = vpop.f32.mrf.mxu0
        %v1001 = vadd.f32 0.0, %v1000
        %v1002 = vpop.f32.mrf.mxu0
        %1003 = vmatprep.mubr.bf16.mxu0 %v700
        %1004 = vmatmul.mubr.bf16.gmra.mxu0 %v699
        %v1005 = vpop.f32.mrf.mxu0
        %v1006 = vadd.f32 0.0, %v1005
        %v1007 = vpop.f32.mrf.mxu0
        %v1008 = vpop.f32.mrf.mxu0
        %v1009 = vadd.f32 0.0, %v1008
        %v1010 = vpop.f32.mrf.mxu0
        %1011 = vmatprep.mubr.bf16.mxu0 %v702
        %1012 = vmatmul.mubr.bf16.gmra.mxu0 %v701
        %v1013 = vpop.f32.mrf.mxu0
        %v1014 = vadd.f32 0.0, %v1013
        %v1015 = vpop.f32.mrf.mxu0
        %v1016 = vpop.f32.mrf.mxu0
        %v1017 = vadd.f32 0.0, %v1016
        %v1018 = vpop.f32.mrf.mxu0
        %1019 = vmatprep.mubr.bf16.mxu0 %v704
        %1020 = vmatmul.mubr.bf16.gmra.mxu0 %v703
        %v1021 = vpop.f32.mrf.mxu0
        %v1022 = vadd.f32 0.0, %v1021
        %v1023 = vpop.f32.mrf.mxu0
        %v1024 = vpop.f32.mrf.mxu0
        %v1025 = vadd.f32 0.0, %v1024
        %v1026 = vpop.f32.mrf.mxu0
        %1027 = vmatprep.mubr.bf16.mxu0 %v706
        %1028 = vmatmul.mubr.bf16.gmra.mxu0 %v705
        %v1029 = vpop.f32.mrf.mxu0
        %v1030 = vadd.f32 0.0, %v1029
        %v1031 = vpop.f32.mrf.mxu0
        %v1032 = vpop.f32.mrf.mxu0
        %v1033 = vadd.f32 0.0, %v1032
        %v1034 = vpop.f32.mrf.mxu0
        %1035 = vmatprep.mubr.bf16.mxu0 %v708
        %1036 = vmatmul.mubr.bf16.gmra.mxu0 %v707
        %v1037 = vpop.f32.mrf.mxu0
        %v1038 = vadd.f32 0.0, %v1037
        %v1039 = vpop.f32.mrf.mxu0
        %v1040 = vpop.f32.mrf.mxu0
        %v1041 = vadd.f32 0.0, %v1040
        %v1042 = vpop.f32.mrf.mxu0
        %1043 = vmatprep.mubr.bf16.mxu0 %v710
        %1044 = vmatmul.mubr.bf16.gmra.mxu0 %v709
        %v1045 = vpop.f32.mrf.mxu0
        %v1046 = vadd.f32 0.0, %v1045
        %v1047 = vpop.f32.mrf.mxu0
        %v1048 = vpop.f32.mrf.mxu0
        %v1049 = vadd.f32 0.0, %v1048
        %v1050 = vpop.f32.mrf.mxu0
        %1051 = vmatprep.mubr.bf16.mxu0 %v712
        %1052 = vmatmul.mubr.bf16.gmra.mxu0 %v711
        %v1053 = vpop.f32.mrf.mxu0
        %v1054 = vadd.f32 0.0, %v1053
        %v1055 = vpop.f32.mrf.mxu0
        %v1056 = vpop.f32.mrf.mxu0
        %v1057 = vadd.f32 0.0, %v1056
        %v1058 = vpop.f32.mrf.mxu0
        %1059 = vmatprep.mubr.bf16.mxu0 %v714
        %1060 = vmatmul.mubr.bf16.gmra.mxu0 %v713
        %v1061 = vpop.f32.mrf.mxu0
        %v1062 = vadd.f32 0.0, %v1061
        %v1063 = vpop.f32.mrf.mxu0
        %v1064 = vpop.f32.mrf.mxu0
        %v1065 = vadd.f32 0.0, %v1064
        %v1066 = vpop.f32.mrf.mxu0
        %1067 = vmatprep.mubr.bf16.mxu0 %v716
        %1068 = vmatmul.mubr.bf16.gmra.mxu0 %v715
        %v1069 = vpop.f32.mrf.mxu0
        %v1070 = vadd.f32 0.0, %v1069
        %v1071 = vpop.f32.mrf.mxu0
        %v1072 = vpop.f32.mrf.mxu0
        %v1073 = vadd.f32 0.0, %v1072
        %v1074 = vpop.f32.mrf.mxu0
        %1075 = vmatprep.mubr.bf16.mxu0 %v718
        %1076 = vmatmul.mubr.bf16.gmra.mxu0 %v717
        %v1077 = vpop.f32.mrf.mxu0
        %v1078 = vadd.f32 0.0, %v1077
        %v1079 = vpop.f32.mrf.mxu0
        %v1080 = vpop.f32.mrf.mxu0
        %v1081 = vadd.f32 0.0, %v1080
        %v1082 = vpop.f32.mrf.mxu0
        %1083 = vmatprep.mubr.bf16.mxu0 %v720
        %1084 = vmatmul.mubr.bf16.gmra.mxu0 %v719
        %v1085 = vpop.f32.mrf.mxu0
        %v1086 = vadd.f32 0.0, %v1085
        %v1087 = vpop.f32.mrf.mxu0
        %v1088 = vpop.f32.mrf.mxu0
        %v1089 = vadd.f32 0.0, %v1088
        %v1090 = vpop.f32.mrf.mxu0
        %1091 = vmatprep.mubr.bf16.mxu0 %v722
        %1092 = vmatmul.mubr.bf16.gmra.mxu0 %v721
        %v1093 = vpop.f32.mrf.mxu0
        %v1094 = vadd.f32 0.0, %v1093
        %v1095 = vpop.f32.mrf.mxu0
        %v1096 = vpop.f32.mrf.mxu0
        %v1097 = vadd.f32 0.0, %v1096
        %v1098 = vpop.f32.mrf.mxu0
        %1099 = vmatprep.mubr.bf16.mxu0 %v724
        %1100 = vmatmul.mubr.bf16.gmra.mxu0 %v723
        %v1101 = vpop.f32.mrf.mxu0
        %v1102 = vadd.f32 0.0, %v1101
        %v1103 = vpop.f32.mrf.mxu0
        %v1104 = vpop.f32.mrf.mxu0
        %v1105 = vadd.f32 0.0, %v1104
        %v1106 = vpop.f32.mrf.mxu0
        %1107 = vmatprep.mubr.bf16.mxu0 %v726
        %1108 = vmatmul.mubr.bf16.gmra.mxu0 %v725
        %v1109 = vpop.f32.mrf.mxu0
        %v1110 = vadd.f32 0.0, %v1109
        %v1111 = vpop.f32.mrf.mxu0
        %v1112 = vpop.f32.mrf.mxu0
        %v1113 = vadd.f32 0.0, %v1112
        %v1114 = vpop.f32.mrf.mxu0
        %1115 = vmatprep.mubr.bf16.mxu0 %v728
        %1116 = vmatmul.mubr.bf16.gmra.mxu0 %v727
        %v1117 = vpop.f32.mrf.mxu0
        %v1118 = vadd.f32 0.0, %v1117
        %v1119 = vpop.f32.mrf.mxu0
        %v1120 = vpop.f32.mrf.mxu0
        %v1121 = vadd.f32 0.0, %v1120
        %v1122 = vpop.f32.mrf.mxu0
        %1123 = vmatprep.mubr.bf16.mxu0 %v730
        %1124 = vmatmul.mubr.bf16.gmra.mxu0 %v729
        %v1125 = vpop.f32.mrf.mxu0
        %v1126 = vadd.f32 0.0, %v1125
        %v1127 = vpop.f32.mrf.mxu0
        %v1128 = vpop.f32.mrf.mxu0
        %v1129 = vadd.f32 0.0, %v1128
        %v1130 = vpop.f32.mrf.mxu0
        %1131 = vmatprep.mubr.bf16.mxu0 %v732
        %1132 = vmatmul.mubr.bf16.gmra.mxu0 %v731
        %v1133 = vpop.f32.mrf.mxu0
        %v1134 = vadd.f32 0.0, %v1133
        %v1135 = vpop.f32.mrf.mxu0
        %v1136 = vpop.f32.mrf.mxu0
        %v1137 = vadd.f32 0.0, %v1136
        %v1138 = vpop.f32.mrf.mxu0
        %1139 = vmatprep.mubr.bf16.mxu0 %v734
        %1140 = vmatmul.mubr.bf16.gmra.mxu0 %v733
        %v1141 = vpop.f32.mrf.mxu0
        %v1142 = vadd.f32 0.0, %v1141
        %v1143 = vpop.f32.mrf.mxu0
        %v1144 = vpop.f32.mrf.mxu0
        %v1145 = vadd.f32 0.0, %v1144
        %v1146 = vpop.f32.mrf.mxu0
        %1147 = vmatprep.mubr.bf16.mxu0 %v736
        %1148 = vmatmul.mubr.bf16.gmra.mxu0 %v735
        %v1149 = vpop.f32.mrf.mxu0
        %v1150 = vadd.f32 0.0, %v1149
        %v1151 = vpop.f32.mrf.mxu0
        %v1152 = vpop.f32.mrf.mxu0
        %v1153 = vadd.f32 0.0, %v1152
        %v1154 = vpop.f32.mrf.mxu0
        %1155 = vmatprep.mubr.bf16.mxu0 %v738
        %1156 = vmatmul.mubr.bf16.gmra.mxu0 %v737
        %v1157 = vpop.f32.mrf.mxu0
        %v1158 = vadd.f32 0.0, %v1157
        %v1159 = vpop.f32.mrf.mxu0
        %v1160 = vpop.f32.mrf.mxu0
        %v1161 = vadd.f32 0.0, %v1160
        %v1162 = vpop.f32.mrf.mxu0
        %1163 = vmatprep.mubr.bf16.mxu0 %v740
        %1164 = vmatmul.mubr.bf16.gmra.mxu0 %v739
        %v1165 = vpop.f32.mrf.mxu0
        %v1166 = vadd.f32 0.0, %v1165
        %v1167 = vpop.f32.mrf.mxu0
        %v1168 = vpop.f32.mrf.mxu0
        %v1169 = vadd.f32 0.0, %v1168
        %v1170 = vpop.f32.mrf.mxu0
        %1171 = vmatprep.mubr.bf16.mxu0 %v742
        %1172 = vmatmul.mubr.bf16.gmra.mxu0 %v741
        %v1173 = vpop.f32.mrf.mxu0
        %v1174 = vadd.f32 0.0, %v1173
        %v1175 = vpop.f32.mrf.mxu0
        %v1176 = vpop.f32.mrf.mxu0
        %v1177 = vadd.f32 0.0, %v1176
        %v1178 = vpop.f32.mrf.mxu0
        %1179 = vmatprep.mubr.bf16.mxu0 %v744
        %1180 = vmatmul.mubr.bf16.gmra.mxu0 %v743
        %v1181 = vpop.f32.mrf.mxu0
        %v1182 = vadd.f32 0.0, %v1181
        %v1183 = vpop.f32.mrf.mxu0
        %v1184 = vpop.f32.mrf.mxu0
        %v1185 = vadd.f32 0.0, %v1184
        %v1186 = vpop.f32.mrf.mxu0
        %1187 = vmatprep.mubr.bf16.mxu0 %v746
        %1188 = vmatmul.mubr.bf16.gmra.mxu0 %v745
        %v1189 = vpop.f32.mrf.mxu0
        %v1190 = vadd.f32 0.0, %v1189
        %v1191 = vpop.f32.mrf.mxu0
        %v1192 = vpop.f32.mrf.mxu0
        %v1193 = vadd.f32 0.0, %v1192
        %v1194 = vpop.f32.mrf.mxu0
        %1195 = vdwg.mxu0
        %v1196 = vadd.f32 %v331, %v942
        %v1197 = vadd.f32 %v332, %v945
        %v1198 = vadd.f32 %v333, %v950
        %v1199 = vadd.f32 %v334, %v953
        %v1200 = vadd.f32 %v335, %v958
        %v1201 = vadd.f32 %v336, %v961
        %v1202 = vadd.f32 %v337, %v966
        %v1203 = vadd.f32 %v338, %v969
        %v1204 = vadd.f32 %v339, %v974
        %v1205 = vadd.f32 %v340, %v977
        %v1206 = vadd.f32 %v341, %v982
        %v1207 = vadd.f32 %v342, %v985
        %v1208 = vadd.f32 %v343, %v990
        %v1209 = vadd.f32 %v344, %v993
        %v1210 = vadd.f32 %v345, %v998
        %v1211 = vadd.f32 %v346, %v1001
        %v1212 = vadd.f32 %v347, %v1006
        %v1213 = vadd.f32 %v348, %v1009
        %v1214 = vadd.f32 %v349, %v1014
        %v1215 = vadd.f32 %v350, %v1017
        %v1216 = vadd.f32 %v351, %v1022
        %v1217 = vadd.f32 %v352, %v1025
        %v1218 = vadd.f32 %v353, %v1030
        %v1219 = vadd.f32 %v354, %v1033
        %v1220 = vadd.f32 %v355, %v1038
        %v1221 = vadd.f32 %v356, %v1041
        %v1222 = vadd.f32 %v357, %v1046
        %v1223 = vadd.f32 %v358, %v1049
        %v1224 = vadd.f32 %v359, %v1054
        %v1225 = vadd.f32 %v360, %v1057
        %v1226 = vadd.f32 %v361, %v1062
        %v1227 = vadd.f32 %v362, %v1065
        %v1228 = vadd.f32 %v363, %v1070
        %v1229 = vadd.f32 %v364, %v1073
        %v1230 = vadd.f32 %v365, %v1078
        %v1231 = vadd.f32 %v366, %v1081
        %v1232 = vadd.f32 %v367, %v1086
        %v1233 = vadd.f32 %v368, %v1089
        %v1234 = vadd.f32 %v369, %v1094
        %v1235 = vadd.f32 %v370, %v1097
        %v1236 = vadd.f32 %v371, %v1102
        %v1237 = vadd.f32 %v372, %v1105
        %v1238 = vadd.f32 %v373, %v1110
        %v1239 = vadd.f32 %v374, %v1113
        %v1240 = vadd.f32 %v375, %v1118
        %v1241 = vadd.f32 %v376, %v1121
        %v1242 = vadd.f32 %v377, %v1126
        %v1243 = vadd.f32 %v378, %v1129
        %v1244 = vadd.f32 %v379, %v1134
        %v1245 = vadd.f32 %v380, %v1137
        %v1246 = vadd.f32 %v381, %v1142
        %v1247 = vadd.f32 %v382, %v1145
        %v1248 = vadd.f32 %v383, %v1150
        %v1249 = vadd.f32 %v384, %v1153
        %v1250 = vadd.f32 %v385, %v1158
        %v1251 = vadd.f32 %v386, %v1161
        %v1252 = vadd.f32 %v387, %v1166
        %v1253 = vadd.f32 %v388, %v1169
        %v1254 = vadd.f32 %v389, %v1174
        %v1255 = vadd.f32 %v390, %v1177
        %v1256 = vadd.f32 %v391, %v1182
        %v1257 = vadd.f32 %v392, %v1185
        %v1258 = vadd.f32 %v393, %v1190
        %v1259 = vadd.f32 %v394, %v1193
        %1260 = vst [vmem:[#allocation2] sm:$0xff] %v1196
        %1261 = vst [vmem:[#allocation2 + $0x8] sm:$0xff] %v1197
        %1262 = vst [vmem:[#allocation2 + $0x10] sm:$0xff] %v1198
        %1263 = vst [vmem:[#allocation2 + $0x18] sm:$0xff] %v1199
        %1264 = vst [vmem:[#allocation2 + $0x20] sm:$0xff] %v1200
        %1265 = vst [vmem:[#allocation2 + $0x28] sm:$0xff] %v1201
        %1266 = vst [vmem:[#allocation2 + $0x30] sm:$0xff] %v1202
        %1267 = vst [vmem:[#allocation2 + $0x38] sm:$0xff] %v1203
        %1268 = vst [vmem:[#allocation2 + $0x40] sm:$0xff] %v1204
        %1269 = vst [vmem:[#allocation2 + $0x48] sm:$0xff] %v1205
        %1270 = vst [vmem:[#allocation2 + $0x50] sm:$0xff] %v1206
        %1271 = vst [vmem:[#allocation2 + $0x58] sm:$0xff] %v1207
        %1272 = vst [vmem:[#allocation2 + $0x60] sm:$0xff] %v1208
        %1273 = vst [vmem:[#allocation2 + $0x68] sm:$0xff] %v1209
        %1274 = vst [vmem:[#allocation2 + $0x70] sm:$0xff] %v1210
        %1275 = vst [vmem:[#allocation2 + $0x78] sm:$0xff] %v1211
        %1276 = vst [vmem:[#allocation2 + $0x80] sm:$0xff] %v1212
        %1277 = vst [vmem:[#allocation2 + $0x88] sm:$0xff] %v1213
        %1278 = vst [vmem:[#allocation2 + $0x90] sm:$0xff] %v1214
        %1279 = vst [vmem:[#allocation2 + $0x98] sm:$0xff] %v1215
        %1280 = vst [vmem:[#allocation2 + $0xa0] sm:$0xff] %v1216
        %1281 = vst [vmem:[#allocation2 + $0xa8] sm:$0xff] %v1217
        %1282 = vst [vmem:[#allocation2 + $0xb0] sm:$0xff] %v1218
        %1283 = vst [vmem:[#allocation2 + $0xb8] sm:$0xff] %v1219
        %1284 = vst [vmem:[#allocation2 + $0xc0] sm:$0xff] %v1220
        %1285 = vst [vmem:[#allocation2 + $0xc8] sm:$0xff] %v1221
        %1286 = vst [vmem:[#allocation2 + $0xd0] sm:$0xff] %v1222
        %1287 = vst [vmem:[#allocation2 + $0xd8] sm:$0xff] %v1223
        %1288 = vst [vmem:[#allocation2 + $0xe0] sm:$0xff] %v1224
        %1289 = vst [vmem:[#allocation2 + $0xe8] sm:$0xff] %v1225
        %1290 = vst [vmem:[#allocation2 + $0xf0] sm:$0xff] %v1226
        %1291 = vst [vmem:[#allocation2 + $0xf8] sm:$0xff] %v1227
        %1292 = vst [vmem:[#allocation2 + $0x100] sm:$0xff] %v1228
        %1293 = vst [vmem:[#allocation2 + $0x108] sm:$0xff] %v1229
        %1294 = vst [vmem:[#allocation2 + $0x110] sm:$0xff] %v1230
        %1295 = vst [vmem:[#allocation2 + $0x118] sm:$0xff] %v1231
        %1296 = vst [vmem:[#allocation2 + $0x120] sm:$0xff] %v1232
        %1297 = vst [vmem:[#allocation2 + $0x128] sm:$0xff] %v1233
        %1298 = vst [vmem:[#allocation2 + $0x130] sm:$0xff] %v1234
        %1299 = vst [vmem:[#allocation2 + $0x138] sm:$0xff] %v1235
        %1300 = vst [vmem:[#allocation2 + $0x140] sm:$0xff] %v1236
        %1301 = vst [vmem:[#allocation2 + $0x148] sm:$0xff] %v1237
        %1302 = vst [vmem:[#allocation2 + $0x150] sm:$0xff] %v1238
        %1303 = vst [vmem:[#allocation2 + $0x158] sm:$0xff] %v1239
        %1304 = vst [vmem:[#allocation2 + $0x160] sm:$0xff] %v1240
        %1305 = vst [vmem:[#allocation2 + $0x168] sm:$0xff] %v1241
        %1306 = vst [vmem:[#allocation2 + $0x170] sm:$0xff] %v1242
        %1307 = vst [vmem:[#allocation2 + $0x178] sm:$0xff] %v1243
        %1308 = vst [vmem:[#allocation2 + $0x180] sm:$0xff] %v1244
        %1309 = vst [vmem:[#allocation2 + $0x188] sm:$0xff] %v1245
        %1310 = vst [vmem:[#allocation2 + $0x190] sm:$0xff] %v1246
        %1311 = vst [vmem:[#allocation2 + $0x198] sm:$0xff] %v1247
        %1312 = vst [vmem:[#allocation2 + $0x1a0] sm:$0xff] %v1248
        %1313 = vst [vmem:[#allocation2 + $0x1a8] sm:$0xff] %v1249
        %1314 = vst [vmem:[#allocation2 + $0x1b0] sm:$0xff] %v1250
        %1315 = vst [vmem:[#allocation2 + $0x1b8] sm:$0xff] %v1251
        %1316 = vst [vmem:[#allocation2 + $0x1c0] sm:$0xff] %v1252
        %1317 = vst [vmem:[#allocation2 + $0x1c8] sm:$0xff] %v1253
        %1318 = vst [vmem:[#allocation2 + $0x1d0] sm:$0xff] %v1254
        %1319 = vst [vmem:[#allocation2 + $0x1d8] sm:$0xff] %v1255
        %1320 = vst [vmem:[#allocation2 + $0x1e0] sm:$0xff] %v1256
        %1321 = vst [vmem:[#allocation2 + $0x1e8] sm:$0xff] %v1257
        %1322 = vst [vmem:[#allocation2 + $0x1f0] sm:$0xff] %v1258
        %1323 = vst [vmem:[#allocation2 + $0x1f8] sm:$0xff] %v1259
        // Predicated region
        $region45: #{tpu_custom_call.1} parent=31 // pred_check
          %p1324 = pneg %p263
        $region46: #{tpu_custom_call.1} parent=31 // pred_check_branch
          %1326 = sbr.rel (%p1324) target = $region48
        $region47: #{tpu_custom_call.1} parent=31 // pred_region
          %v1327 = vld [vmem:[#allocation2] sm:$0xff]
          %v1328 = vld [vmem:[#allocation2 + $0x8] sm:$0xff]
          %v1329 = vld [vmem:[#allocation2 + $0x10] sm:$0xff]
          %v1330 = vld [vmem:[#allocation2 + $0x18] sm:$0xff]
          %v1331 = vld [vmem:[#allocation2 + $0x20] sm:$0xff]
          %v1332 = vld [vmem:[#allocation2 + $0x28] sm:$0xff]
          %v1333 = vld [vmem:[#allocation2 + $0x30] sm:$0xff]
          %v1334 = vld [vmem:[#allocation2 + $0x38] sm:$0xff]
          %v1335 = vld [vmem:[#allocation2 + $0x40] sm:$0xff]
          %v1336 = vld [vmem:[#allocation2 + $0x48] sm:$0xff]
          %v1337 = vld [vmem:[#allocation2 + $0x50] sm:$0xff]
          %v1338 = vld [vmem:[#allocation2 + $0x58] sm:$0xff]
          %v1339 = vld [vmem:[#allocation2 + $0x60] sm:$0xff]
          %v1340 = vld [vmem:[#allocation2 + $0x68] sm:$0xff]
          %v1341 = vld [vmem:[#allocation2 + $0x70] sm:$0xff]
          %v1342 = vld [vmem:[#allocation2 + $0x78] sm:$0xff]
          %v1343 = vld [vmem:[#allocation2 + $0x80] sm:$0xff]
          %v1344 = vld [vmem:[#allocation2 + $0x88] sm:$0xff]
          %v1345 = vld [vmem:[#allocation2 + $0x90] sm:$0xff]
          %v1346 = vld [vmem:[#allocation2 + $0x98] sm:$0xff]
          %v1347 = vld [vmem:[#allocation2 + $0xa0] sm:$0xff]
          %v1348 = vld [vmem:[#allocation2 + $0xa8] sm:$0xff]
          %v1349 = vld [vmem:[#allocation2 + $0xb0] sm:$0xff]
          %v1350 = vld [vmem:[#allocation2 + $0xb8] sm:$0xff]
          %v1351 = vld [vmem:[#allocation2 + $0xc0] sm:$0xff]
          %v1352 = vld [vmem:[#allocation2 + $0xc8] sm:$0xff]
          %v1353 = vld [vmem:[#allocation2 + $0xd0] sm:$0xff]
          %v1354 = vld [vmem:[#allocation2 + $0xd8] sm:$0xff]
          %v1355 = vld [vmem:[#allocation2 + $0xe0] sm:$0xff]
          %v1356 = vld [vmem:[#allocation2 + $0xe8] sm:$0xff]
          %v1357 = vld [vmem:[#allocation2 + $0xf0] sm:$0xff]
          %v1358 = vld [vmem:[#allocation2 + $0xf8] sm:$0xff]
          %v1359 = vld [vmem:[#allocation2 + $0x100] sm:$0xff]
          %v1360 = vld [vmem:[#allocation2 + $0x108] sm:$0xff]
          %v1361 = vld [vmem:[#allocation2 + $0x110] sm:$0xff]
          %v1362 = vld [vmem:[#allocation2 + $0x118] sm:$0xff]
          %v1363 = vld [vmem:[#allocation2 + $0x120] sm:$0xff]
          %v1364 = vld [vmem:[#allocation2 + $0x128] sm:$0xff]
          %v1365 = vld [vmem:[#allocation2 + $0x130] sm:$0xff]
          %v1366 = vld [vmem:[#allocation2 + $0x138] sm:$0xff]
          %v1367 = vld [vmem:[#allocation2 + $0x140] sm:$0xff]
          %v1368 = vld [vmem:[#allocation2 + $0x148] sm:$0xff]
          %v1369 = vld [vmem:[#allocation2 + $0x150] sm:$0xff]
          %v1370 = vld [vmem:[#allocation2 + $0x158] sm:$0xff]
          %v1371 = vld [vmem:[#allocation2 + $0x160] sm:$0xff]
          %v1372 = vld [vmem:[#allocation2 + $0x168] sm:$0xff]
          %v1373 = vld [vmem:[#allocation2 + $0x170] sm:$0xff]
          %v1374 = vld [vmem:[#allocation2 + $0x178] sm:$0xff]
          %v1375 = vld [vmem:[#allocation2 + $0x180] sm:$0xff]
          %v1376 = vld [vmem:[#allocation2 + $0x188] sm:$0xff]
          %v1377 = vld [vmem:[#allocation2 + $0x190] sm:$0xff]
          %v1378 = vld [vmem:[#allocation2 + $0x198] sm:$0xff]
          %v1379 = vld [vmem:[#allocation2 + $0x1a0] sm:$0xff]
          %v1380 = vld [vmem:[#allocation2 + $0x1a8] sm:$0xff]
          %v1381 = vld [vmem:[#allocation2 + $0x1b0] sm:$0xff]
          %v1382 = vld [vmem:[#allocation2 + $0x1b8] sm:$0xff]
          %v1383 = vld [vmem:[#allocation2 + $0x1c0] sm:$0xff]
          %v1384 = vld [vmem:[#allocation2 + $0x1c8] sm:$0xff]
          %v1385 = vld [vmem:[#allocation2 + $0x1d0] sm:$0xff]
          %v1386 = vld [vmem:[#allocation2 + $0x1d8] sm:$0xff]
          %v1387 = vld [vmem:[#allocation2 + $0x1e0] sm:$0xff]
          %v1388 = vld [vmem:[#allocation2 + $0x1e8] sm:$0xff]
          %v1389 = vld [vmem:[#allocation2 + $0x1f0] sm:$0xff]
          %v1390 = vld [vmem:[#allocation2 + $0x1f8] sm:$0xff]
          %v1391 = vld [vmem:[%s260] sm:$0x1]
          %v1392 = vlaneseq
          %v1393 = vshrl.u32 %v1392, 7
          %v1394 = vsub.s32 0, %v1393
          %v1395 = vrot.slane %v1391, %v1394
          %v1396 = vmul.f32 %v1327, %v1395
          %v1397 = vmul.f32 %v1328, %v1395
          %v1398 = vmul.f32 %v1329, %v1395
          %v1399 = vmul.f32 %v1330, %v1395
          %v1400 = vmul.f32 %v1331, %v1395
          %v1401 = vmul.f32 %v1332, %v1395
          %v1402 = vmul.f32 %v1333, %v1395
          %v1403 = vmul.f32 %v1334, %v1395
          %v1404 = vmul.f32 %v1335, %v1395
          %v1405 = vmul.f32 %v1336, %v1395
          %v1406 = vmul.f32 %v1337, %v1395
          %v1407 = vmul.f32 %v1338, %v1395
          %v1408 = vmul.f32 %v1339, %v1395
          %v1409 = vmul.f32 %v1340, %v1395
          %v1410 = vmul.f32 %v1341, %v1395
          %v1411 = vmul.f32 %v1342, %v1395
          %v1412 = vmul.f32 %v1343, %v1395
          %v1413 = vmul.f32 %v1344, %v1395
          %v1414 = vmul.f32 %v1345, %v1395
          %v1415 = vmul.f32 %v1346, %v1395
          %v1416 = vmul.f32 %v1347, %v1395
          %v1417 = vmul.f32 %v1348, %v1395
          %v1418 = vmul.f32 %v1349, %v1395
          %v1419 = vmul.f32 %v1350, %v1395
          %v1420 = vmul.f32 %v1351, %v1395
          %v1421 = vmul.f32 %v1352, %v1395
          %v1422 = vmul.f32 %v1353, %v1395
          %v1423 = vmul.f32 %v1354, %v1395
          %v1424 = vmul.f32 %v1355, %v1395
          %v1425 = vmul.f32 %v1356, %v1395
          %v1426 = vmul.f32 %v1357, %v1395
          %v1427 = vmul.f32 %v1358, %v1395
          %v1428 = vmul.f32 %v1359, %v1395
          %v1429 = vmul.f32 %v1360, %v1395
          %v1430 = vmul.f32 %v1361, %v1395
          %v1431 = vmul.f32 %v1362, %v1395
          %v1432 = vmul.f32 %v1363, %v1395
          %v1433 = vmul.f32 %v1364, %v1395
          %v1434 = vmul.f32 %v1365, %v1395
          %v1435 = vmul.f32 %v1366, %v1395
          %v1436 = vmul.f32 %v1367, %v1395
          %v1437 = vmul.f32 %v1368, %v1395
          %v1438 = vmul.f32 %v1369, %v1395
          %v1439 = vmul.f32 %v1370, %v1395
          %v1440 = vmul.f32 %v1371, %v1395
          %v1441 = vmul.f32 %v1372, %v1395
          %v1442 = vmul.f32 %v1373, %v1395
          %v1443 = vmul.f32 %v1374, %v1395
          %v1444 = vmul.f32 %v1375, %v1395
          %v1445 = vmul.f32 %v1376, %v1395
          %v1446 = vmul.f32 %v1377, %v1395
          %v1447 = vmul.f32 %v1378, %v1395
          %v1448 = vmul.f32 %v1379, %v1395
          %v1449 = vmul.f32 %v1380, %v1395
          %v1450 = vmul.f32 %v1381, %v1395
          %v1451 = vmul.f32 %v1382, %v1395
          %v1452 = vmul.f32 %v1383, %v1395
          %v1453 = vmul.f32 %v1384, %v1395
          %v1454 = vmul.f32 %v1385, %v1395
          %v1455 = vmul.f32 %v1386, %v1395
          %v1456 = vmul.f32 %v1387, %v1395
          %v1457 = vmul.f32 %v1388, %v1395
          %v1458 = vmul.f32 %v1389, %v1395
          %v1459 = vmul.f32 %v1390, %v1395
          %v1460 = vld [vmem:[%s260 + $0x1] sm:$0x1]
          %v1461 = vlaneseq
          %v1462 = vshrl.u32 %v1461, 7
          %v1463 = vsub.s32 0, %v1462
          %v1464 = vrot.slane %v1460, %v1463
          %v1465 = vadd.f32 %v1396, %v1464
          %v1466 = vadd.f32 %v1397, %v1464
          %v1467 = vadd.f32 %v1398, %v1464
          %v1468 = vadd.f32 %v1399, %v1464
          %v1469 = vadd.f32 %v1400, %v1464
          %v1470 = vadd.f32 %v1401, %v1464
          %v1471 = vadd.f32 %v1402, %v1464
          %v1472 = vadd.f32 %v1403, %v1464
          %v1473 = vadd.f32 %v1404, %v1464
          %v1474 = vadd.f32 %v1405, %v1464
          %v1475 = vadd.f32 %v1406, %v1464
          %v1476 = vadd.f32 %v1407, %v1464
          %v1477 = vadd.f32 %v1408, %v1464
          %v1478 = vadd.f32 %v1409, %v1464
          %v1479 = vadd.f32 %v1410, %v1464
          %v1480 = vadd.f32 %v1411, %v1464
          %v1481 = vadd.f32 %v1412, %v1464
          %v1482 = vadd.f32 %v1413, %v1464
          %v1483 = vadd.f32 %v1414, %v1464
          %v1484 = vadd.f32 %v1415, %v1464
          %v1485 = vadd.f32 %v1416, %v1464
          %v1486 = vadd.f32 %v1417, %v1464
          %v1487 = vadd.f32 %v1418, %v1464
          %v1488 = vadd.f32 %v1419, %v1464
          %v1489 = vadd.f32 %v1420, %v1464
          %v1490 = vadd.f32 %v1421, %v1464
          %v1491 = vadd.f32 %v1422, %v1464
          %v1492 = vadd.f32 %v1423, %v1464
          %v1493 = vadd.f32 %v1424, %v1464
          %v1494 = vadd.f32 %v1425, %v1464
          %v1495 = vadd.f32 %v1426, %v1464
          %v1496 = vadd.f32 %v1427, %v1464
          %v1497 = vadd.f32 %v1428, %v1464
          %v1498 = vadd.f32 %v1429, %v1464
          %v1499 = vadd.f32 %v1430, %v1464
          %v1500 = vadd.f32 %v1431, %v1464
          %v1501 = vadd.f32 %v1432, %v1464
          %v1502 = vadd.f32 %v1433, %v1464
          %v1503 = vadd.f32 %v1434, %v1464
          %v1504 = vadd.f32 %v1435, %v1464
          %v1505 = vadd.f32 %v1436, %v1464
          %v1506 = vadd.f32 %v1437, %v1464
          %v1507 = vadd.f32 %v1438, %v1464
          %v1508 = vadd.f32 %v1439, %v1464
          %v1509 = vadd.f32 %v1440, %v1464
          %v1510 = vadd.f32 %v1441, %v1464
          %v1511 = vadd.f32 %v1442, %v1464
          %v1512 = vadd.f32 %v1443, %v1464
          %v1513 = vadd.f32 %v1444, %v1464
          %v1514 = vadd.f32 %v1445, %v1464
          %v1515 = vadd.f32 %v1446, %v1464
          %v1516 = vadd.f32 %v1447, %v1464
          %v1517 = vadd.f32 %v1448, %v1464
          %v1518 = vadd.f32 %v1449, %v1464
          %v1519 = vadd.f32 %v1450, %v1464
          %v1520 = vadd.f32 %v1451, %v1464
          %v1521 = vadd.f32 %v1452, %v1464
          %v1522 = vadd.f32 %v1453, %v1464
          %v1523 = vadd.f32 %v1454, %v1464
          %v1524 = vadd.f32 %v1455, %v1464
          %v1525 = vadd.f32 %v1456, %v1464
          %v1526 = vadd.f32 %v1457, %v1464
          %v1527 = vadd.f32 %v1458, %v1464
          %v1528 = vadd.f32 %v1459, %v1464
          %v1529 = vmax.f32 %v1465, 0.0
          %v1530 = vmax.f32 %v1466, 0.0
          %v1531 = vmax.f32 %v1467, 0.0
          %v1532 = vmax.f32 %v1468, 0.0
          %v1533 = vmax.f32 %v1469, 0.0
          %v1534 = vmax.f32 %v1470, 0.0
          %v1535 = vmax.f32 %v1471, 0.0
          %v1536 = vmax.f32 %v1472, 0.0
          %v1537 = vmax.f32 %v1473, 0.0
          %v1538 = vmax.f32 %v1474, 0.0
          %v1539 = vmax.f32 %v1475, 0.0
          %v1540 = vmax.f32 %v1476, 0.0
          %v1541 = vmax.f32 %v1477, 0.0
          %v1542 = vmax.f32 %v1478, 0.0
          %v1543 = vmax.f32 %v1479, 0.0
          %v1544 = vmax.f32 %v1480, 0.0
          %v1545 = vmax.f32 %v1481, 0.0
          %v1546 = vmax.f32 %v1482, 0.0
          %v1547 = vmax.f32 %v1483, 0.0
          %v1548 = vmax.f32 %v1484, 0.0
          %v1549 = vmax.f32 %v1485, 0.0
          %v1550 = vmax.f32 %v1486, 0.0
          %v1551 = vmax.f32 %v1487, 0.0
          %v1552 = vmax.f32 %v1488, 0.0
          %v1553 = vmax.f32 %v1489, 0.0
          %v1554 = vmax.f32 %v1490, 0.0
          %v1555 = vmax.f32 %v1491, 0.0
          %v1556 = vmax.f32 %v1492, 0.0
          %v1557 = vmax.f32 %v1493, 0.0
          %v1558 = vmax.f32 %v1494, 0.0
          %v1559 = vmax.f32 %v1495, 0.0
          %v1560 = vmax.f32 %v1496, 0.0
          %v1561 = vmax.f32 %v1497, 0.0
          %v1562 = vmax.f32 %v1498, 0.0
          %v1563 = vmax.f32 %v1499, 0.0
          %v1564 = vmax.f32 %v1500, 0.0
          %v1565 = vmax.f32 %v1501, 0.0
          %v1566 = vmax.f32 %v1502, 0.0
          %v1567 = vmax.f32 %v1503, 0.0
          %v1568 = vmax.f32 %v1504, 0.0
          %v1569 = vmax.f32 %v1505, 0.0
          %v1570 = vmax.f32 %v1506, 0.0
          %v1571 = vmax.f32 %v1507, 0.0
          %v1572 = vmax.f32 %v1508, 0.0
          %v1573 = vmax.f32 %v1509, 0.0
          %v1574 = vmax.f32 %v1510, 0.0
          %v1575 = vmax.f32 %v1511, 0.0
          %v1576 = vmax.f32 %v1512, 0.0
          %v1577 = vmax.f32 %v1513, 0.0
          %v1578 = vmax.f32 %v1514, 0.0
          %v1579 = vmax.f32 %v1515, 0.0
          %v1580 = vmax.f32 %v1516, 0.0
          %v1581 = vmax.f32 %v1517, 0.0
          %v1582 = vmax.f32 %v1518, 0.0
          %v1583 = vmax.f32 %v1519, 0.0
          %v1584 = vmax.f32 %v1520, 0.0
          %v1585 = vmax.f32 %v1521, 0.0
          %v1586 = vmax.f32 %v1522, 0.0
          %v1587 = vmax.f32 %v1523, 0.0
          %v1588 = vmax.f32 %v1524, 0.0
          %v1589 = vmax.f32 %v1525, 0.0
          %v1590 = vmax.f32 %v1526, 0.0
          %v1591 = vmax.f32 %v1527, 0.0
          %v1592 = vmax.f32 %v1528, 0.0
          %v1593 = vpack.c.bf16 %v1530, %v1529
          %v1594 = vpack.c.bf16 %v1532, %v1531
          %v1595 = vpack.c.bf16 %v1534, %v1533
          %v1596 = vpack.c.bf16 %v1536, %v1535
          %v1597 = vpack.c.bf16 %v1538, %v1537
          %v1598 = vpack.c.bf16 %v1540, %v1539
          %v1599 = vpack.c.bf16 %v1542, %v1541
          %v1600 = vpack.c.bf16 %v1544, %v1543
          %v1601 = vpack.c.bf16 %v1546, %v1545
          %v1602 = vpack.c.bf16 %v1548, %v1547
          %v1603 = vpack.c.bf16 %v1550, %v1549
          %v1604 = vpack.c.bf16 %v1552, %v1551
          %v1605 = vpack.c.bf16 %v1554, %v1553
          %v1606 = vpack.c.bf16 %v1556, %v1555
          %v1607 = vpack.c.bf16 %v1558, %v1557
          %v1608 = vpack.c.bf16 %v1560, %v1559
          %v1609 = vpack.c.bf16 %v1562, %v1561
          %v1610 = vpack.c.bf16 %v1564, %v1563
          %v1611 = vpack.c.bf16 %v1566, %v1565
          %v1612 = vpack.c.bf16 %v1568, %v1567
          %v1613 = vpack.c.bf16 %v1570, %v1569
          %v1614 = vpack.c.bf16 %v1572, %v1571
          %v1615 = vpack.c.bf16 %v1574, %v1573
          %v1616 = vpack.c.bf16 %v1576, %v1575
          %v1617 = vpack.c.bf16 %v1578, %v1577
          %v1618 = vpack.c.bf16 %v1580, %v1579
          %v1619 = vpack.c.bf16 %v1582, %v1581
          %v1620 = vpack.c.bf16 %v1584, %v1583
          %v1621 = vpack.c.bf16 %v1586, %v1585
          %v1622 = vpack.c.bf16 %v1588, %v1587
          %v1623 = vpack.c.bf16 %v1590, %v1589
          %v1624 = vpack.c.bf16 %v1592, %v1591
          %v1657 = vunpack.c.l.b16 %v1593
          %v1658 = vunpack.c.h.b16 %v1593
          %v1659 = vunpack.c.l.b16 %v1594
          %v1660 = vunpack.c.h.b16 %v1594
          %v1661 = vunpack.c.l.b16 %v1595
          %v1662 = vunpack.c.h.b16 %v1595
          %v1663 = vunpack.c.l.b16 %v1596
          %v1664 = vunpack.c.h.b16 %v1596
          %v1665 = vunpack.c.l.b16 %v1597
          %v1666 = vunpack.c.h.b16 %v1597
          %v1667 = vunpack.c.l.b16 %v1598
          %v1668 = vunpack.c.h.b16 %v1598
          %v1669 = vunpack.c.l.b16 %v1599
          %v1670 = vunpack.c.h.b16 %v1599
          %v1671 = vunpack.c.l.b16 %v1600
          %v1672 = vunpack.c.h.b16 %v1600
          %v1673 = vunpack.c.l.b16 %v1601
          %v1674 = vunpack.c.h.b16 %v1601
          %v1675 = vunpack.c.l.b16 %v1602
          %v1676 = vunpack.c.h.b16 %v1602
          %v1677 = vunpack.c.l.b16 %v1603
          %v1678 = vunpack.c.h.b16 %v1603
          %v1679 = vunpack.c.l.b16 %v1604
          %v1680 = vunpack.c.h.b16 %v1604
          %v1681 = vunpack.c.l.b16 %v1605
          %v1682 = vunpack.c.h.b16 %v1605
          %v1683 = vunpack.c.l.b16 %v1606
          %v1684 = vunpack.c.h.b16 %v1606
          %v1685 = vunpack.c.l.b16 %v1607
          %v1686 = vunpack.c.h.b16 %v1607
          %v1687 = vunpack.c.l.b16 %v1608
          %v1688 = vunpack.c.h.b16 %v1608
          %v1689 = vunpack.c.l.b16 %v1609
          %v1690 = vunpack.c.h.b16 %v1609
          %v1691 = vunpack.c.l.b16 %v1610
          %v1692 = vunpack.c.h.b16 %v1610
          %v1693 = vunpack.c.l.b16 %v1611
          %v1694 = vunpack.c.h.b16 %v1611
          %v1695 = vunpack.c.l.b16 %v1612
          %v1696 = vunpack.c.h.b16 %v1612
          %v1697 = vunpack.c.l.b16 %v1613
          %v1698 = vunpack.c.h.b16 %v1613
          %v1699 = vunpack.c.l.b16 %v1614
          %v1700 = vunpack.c.h.b16 %v1614
          %v1701 = vunpack.c.l.b16 %v1615
          %v1702 = vunpack.c.h.b16 %v1615
          %v1703 = vunpack.c.l.b16 %v1616
          %v1704 = vunpack.c.h.b16 %v1616
          %v1705 = vunpack.c.l.b16 %v1617
          %v1706 = vunpack.c.h.b16 %v1617
          %v1707 = vunpack.c.l.b16 %v1618
          %v1708 = vunpack.c.h.b16 %v1618
          %v1709 = vunpack.c.l.b16 %v1619
          %v1710 = vunpack.c.h.b16 %v1619
          %v1711 = vunpack.c.l.b16 %v1620
          %v1712 = vunpack.c.h.b16 %v1620
          %v1713 = vunpack.c.l.b16 %v1621
          %v1714 = vunpack.c.h.b16 %v1621
          %v1715 = vunpack.c.l.b16 %v1622
          %v1716 = vunpack.c.h.b16 %v1622
          %v1717 = vunpack.c.l.b16 %v1623
          %v1718 = vunpack.c.h.b16 %v1623
          %v1719 = vunpack.c.l.b16 %v1624
          %v1720 = vunpack.c.h.b16 %v1624
          %v1721 = vpack.c.b16 %v1657, %v1657
          %v1722 = vpack.c.b16 %v1658, %v1658
          %v1723 = vpack.c.b16 %v1659, %v1659
          %v1724 = vpack.c.b16 %v1660, %v1660
          %v1725 = vpack.c.b16 %v1661, %v1661
          %v1726 = vpack.c.b16 %v1662, %v1662
          %v1727 = vpack.c.b16 %v1663, %v1663
          %v1728 = vpack.c.b16 %v1664, %v1664
          %v1729 = vpack.c.b16 %v1665, %v1665
          %v1730 = vpack.c.b16 %v1666, %v1666
          %v1731 = vpack.c.b16 %v1667, %v1667
          %v1732 = vpack.c.b16 %v1668, %v1668
          %v1733 = vpack.c.b16 %v1669, %v1669
          %v1734 = vpack.c.b16 %v1670, %v1670
          %v1735 = vpack.c.b16 %v1671, %v1671
          %v1736 = vpack.c.b16 %v1672, %v1672
          %v1737 = vpack.c.b16 %v1673, %v1673
          %v1738 = vpack.c.b16 %v1674, %v1674
          %v1739 = vpack.c.b16 %v1675, %v1675
          %v1740 = vpack.c.b16 %v1676, %v1676
          %v1741 = vpack.c.b16 %v1677, %v1677
          %v1742 = vpack.c.b16 %v1678, %v1678
          %v1743 = vpack.c.b16 %v1679, %v1679
          %v1744 = vpack.c.b16 %v1680, %v1680
          %v1745 = vpack.c.b16 %v1681, %v1681
          %v1746 = vpack.c.b16 %v1682, %v1682
          %v1747 = vpack.c.b16 %v1683, %v1683
          %v1748 = vpack.c.b16 %v1684, %v1684
          %v1749 = vpack.c.b16 %v1685, %v1685
          %v1750 = vpack.c.b16 %v1686, %v1686
          %v1751 = vpack.c.b16 %v1687, %v1687
          %v1752 = vpack.c.b16 %v1688, %v1688
          %v1753 = vpack.c.b16 %v1689, %v1689
          %v1754 = vpack.c.b16 %v1690, %v1690
          %v1755 = vpack.c.b16 %v1691, %v1691
          %v1756 = vpack.c.b16 %v1692, %v1692
          %v1757 = vpack.c.b16 %v1693, %v1693
          %v1758 = vpack.c.b16 %v1694, %v1694
          %v1759 = vpack.c.b16 %v1695, %v1695
          %v1760 = vpack.c.b16 %v1696, %v1696
          %v1761 = vpack.c.b16 %v1697, %v1697
          %v1762 = vpack.c.b16 %v1698, %v1698
          %v1763 = vpack.c.b16 %v1699, %v1699
          %v1764 = vpack.c.b16 %v1700, %v1700
          %v1765 = vpack.c.b16 %v1701, %v1701
          %v1766 = vpack.c.b16 %v1702, %v1702
          %v1767 = vpack.c.b16 %v1703, %v1703
          %v1768 = vpack.c.b16 %v1704, %v1704
          %v1769 = vpack.c.b16 %v1705, %v1705
          %v1770 = vpack.c.b16 %v1706, %v1706
          %v1771 = vpack.c.b16 %v1707, %v1707
          %v1772 = vpack.c.b16 %v1708, %v1708
          %v1773 = vpack.c.b16 %v1709, %v1709
          %v1774 = vpack.c.b16 %v1710, %v1710
          %v1775 = vpack.c.b16 %v1711, %v1711
          %v1776 = vpack.c.b16 %v1712, %v1712
          %v1777 = vpack.c.b16 %v1713, %v1713
          %v1778 = vpack.c.b16 %v1714, %v1714
          %v1779 = vpack.c.b16 %v1715, %v1715
          %v1780 = vpack.c.b16 %v1716, %v1716
          %v1781 = vpack.c.b16 %v1717, %v1717
          %v1782 = vpack.c.b16 %v1718, %v1718
          %v1783 = vpack.c.b16 %v1719, %v1719
          %v1784 = vpack.c.b16 %v1720, %v1720
          %1849 = vst [vmem:[%s253] sm:$0xf] %v1721
          %1850 = vst [vmem:[%s253 + $0x4] sm:$0xf] %v1722
          %1851 = vst [vmem:[%s253 + $0x8] sm:$0xf] %v1723
          %1852 = vst [vmem:[%s253 + $0xc] sm:$0xf] %v1724
          %1853 = vst [vmem:[%s253 + $0x10] sm:$0xf] %v1725
          %1854 = vst [vmem:[%s253 + $0x14] sm:$0xf] %v1726
          %1855 = vst [vmem:[%s253 + $0x18] sm:$0xf] %v1727
          %1856 = vst [vmem:[%s253 + $0x1c] sm:$0xf] %v1728
          %1857 = vst [vmem:[%s253 + $0x20] sm:$0xf] %v1729
          %1858 = vst [vmem:[%s253 + $0x24] sm:$0xf] %v1730
          %1859 = vst [vmem:[%s253 + $0x28] sm:$0xf] %v1731
          %1860 = vst [vmem:[%s253 + $0x2c] sm:$0xf] %v1732
          %1861 = vst [vmem:[%s253 + $0x30] sm:$0xf] %v1733
          %1862 = vst [vmem:[%s253 + $0x34] sm:$0xf] %v1734
          %1863 = vst [vmem:[%s253 + $0x38] sm:$0xf] %v1735
          %1864 = vst [vmem:[%s253 + $0x3c] sm:$0xf] %v1736
          %1865 = vst [vmem:[%s253 + $0x40] sm:$0xf] %v1737
          %1866 = vst [vmem:[%s253 + $0x44] sm:$0xf] %v1738
          %1867 = vst [vmem:[%s253 + $0x48] sm:$0xf] %v1739
          %1868 = vst [vmem:[%s253 + $0x4c] sm:$0xf] %v1740
          %1869 = vst [vmem:[%s253 + $0x50] sm:$0xf] %v1741
          %1870 = vst [vmem:[%s253 + $0x54] sm:$0xf] %v1742
          %1871 = vst [vmem:[%s253 + $0x58] sm:$0xf] %v1743
          %1872 = vst [vmem:[%s253 + $0x5c] sm:$0xf] %v1744
          %1873 = vst [vmem:[%s253 + $0x60] sm:$0xf] %v1745
          %1874 = vst [vmem:[%s253 + $0x64] sm:$0xf] %v1746
          %1875 = vst [vmem:[%s253 + $0x68] sm:$0xf] %v1747
          %1876 = vst [vmem:[%s253 + $0x6c] sm:$0xf] %v1748
          %1877 = vst [vmem:[%s253 + $0x70] sm:$0xf] %v1749
          %1878 = vst [vmem:[%s253 + $0x74] sm:$0xf] %v1750
          %1879 = vst [vmem:[%s253 + $0x78] sm:$0xf] %v1751
          %1880 = vst [vmem:[%s253 + $0x7c] sm:$0xf] %v1752
          %1881 = vst [vmem:[%s253 + $0x80] sm:$0xf] %v1753
          %1882 = vst [vmem:[%s253 + $0x84] sm:$0xf] %v1754
          %1883 = vst [vmem:[%s253 + $0x88] sm:$0xf] %v1755
          %1884 = vst [vmem:[%s253 + $0x8c] sm:$0xf] %v1756
          %1885 = vst [vmem:[%s253 + $0x90] sm:$0xf] %v1757
          %1886 = vst [vmem:[%s253 + $0x94] sm:$0xf] %v1758
          %1887 = vst [vmem:[%s253 + $0x98] sm:$0xf] %v1759
          %1888 = vst [vmem:[%s253 + $0x9c] sm:$0xf] %v1760
          %1889 = vst [vmem:[%s253 + $0xa0] sm:$0xf] %v1761
          %1890 = vst [vmem:[%s253 + $0xa4] sm:$0xf] %v1762
          %1891 = vst [vmem:[%s253 + $0xa8] sm:$0xf] %v1763
          %1892 = vst [vmem:[%s253 + $0xac] sm:$0xf] %v1764
          %1893 = vst [vmem:[%s253 + $0xb0] sm:$0xf] %v1765
          %1894 = vst [vmem:[%s253 + $0xb4] sm:$0xf] %v1766
          %1895 = vst [vmem:[%s253 + $0xb8] sm:$0xf] %v1767
          %1896 = vst [vmem:[%s253 + $0xbc] sm:$0xf] %v1768
          %1897 = vst [vmem:[%s253 + $0xc0] sm:$0xf] %v1769
          %1898 = vst [vmem:[%s253 + $0xc4] sm:$0xf] %v1770
          %1899 = vst [vmem:[%s253 + $0xc8] sm:$0xf] %v1771
          %1900 = vst [vmem:[%s253 + $0xcc] sm:$0xf] %v1772
          %1901 = vst [vmem:[%s253 + $0xd0] sm:$0xf] %v1773
          %1902 = vst [vmem:[%s253 + $0xd4] sm:$0xf] %v1774
          %1903 = vst [vmem:[%s253 + $0xd8] sm:$0xf] %v1775
          %1904 = vst [vmem:[%s253 + $0xdc] sm:$0xf] %v1776
          %1905 = vst [vmem:[%s253 + $0xe0] sm:$0xf] %v1777
          %1906 = vst [vmem:[%s253 + $0xe4] sm:$0xf] %v1778
          %1907 = vst [vmem:[%s253 + $0xe8] sm:$0xf] %v1779
          %1908 = vst [vmem:[%s253 + $0xec] sm:$0xf] %v1780
          %1909 = vst [vmem:[%s253 + $0xf0] sm:$0xf] %v1781
          %1910 = vst [vmem:[%s253 + $0xf4] sm:$0xf] %v1782
          %1911 = vst [vmem:[%s253 + $0xf8] sm:$0xf] %v1783
          %1912 = vst [vmem:[%s253 + $0xfc] sm:$0xf] %v1784
        $region48: #{tpu_custom_call.1} parent=31 // pred_fallthru
          _
        %s1913 = sand.u32 %s132, 1
        %s1914 = scalar_lea.sflag [#allocation5], %s1913
        %s1915 = sand.u32 %s132, 1
        %s1916 = smul.addr %s1915, 256
        %s1917 = scalar_lea.vmem [#allocation8], %s1916
        // Predicated region
        $region49: #{tpu_custom_call.1} parent=31 // pred_check
          %p1918 = pneg %p142
        $region50: #{tpu_custom_call.1} parent=31 // pred_check_branch
          %1920 = sbr.rel (%p1918) target = $region52
        $region51: #{tpu_custom_call.1} parent=31 // pred_region
          %s1921 = smul.u32 64, %s26
          %s1923 = ssub.s32 4096, 4096
          %1924 = vsyncadd %s1914, %s1923
          %s1925 = sadd.s32 %s27, %s1921
          %s1926 = smul.addr %s1925, 64
          %s1927 = scalar_lea.hbm %s3, %s1926
          %s1928 = sshll.u32 %s1917, 4
          %s1929 = int_to_ptr.vmem [resolvable:$true] %s1928
          %1934 = dma.vmem_to_hbm [thread:$0]  %s1929, 4096, %s1927, %s1914, 64, 64, 4
        $region52: #{tpu_custom_call.1} parent=31 // pred_fallthru
          _
      $region32: #{tpu_custom_call.1} parent=5 // pred_fallthru
        _
      %p1935 = scmp.le.s32.totalorder 2, %s16
      // Predicated region
      $region53: #{tpu_custom_call.1} parent=5 // pred_check
        %p1936 = pneg %p1935
      $region54: #{tpu_custom_call.1} parent=5 // pred_check_branch
        %1938 = sbr.rel (%p1936) target = $region56
      $region55: #{tpu_custom_call.1} parent=5 // pred_region
        %s1939 = ssub.s32 %s16, 2
        // Predicated region
        $region57: #{tpu_custom_call.1} parent=55 // pred_check
          %p1940 = pneg %p148
        $region58: #{tpu_custom_call.1} parent=55 // pred_check_branch
          %1942 = sbr.rel (%p1940) target = $region60
        $region59: #{tpu_custom_call.1} parent=55 // pred_region
          %s1943 = sand.u32 %s133, 1
          %s1944 = scalar_lea.sflag [#allocation5], %s1943
          %s1945 = sand.u32 %s133, 1
          %s1946 = smul.addr %s1945, 256
          %s1947 = scalar_lea.vmem [#allocation8], %s1946
          %1948 = dma.done %s1944, 4096
        $region60: #{tpu_custom_call.1} parent=55 // pred_fallthru
          _
      $region56: #{tpu_custom_call.1} parent=5 // pred_fallthru
        _
    $region6: #{tpu_custom_call.1} parent=1 // loop_footer
      %s20 = sadd.s32 1, %s16
    $region7: #{tpu_custom_call.1} parent=1 // loop_footer_branch
      %15 = sbr.rel target = $region3
    $region8: #{tpu_custom_call.1} parent=1 // loop_exit
      _
    %1949 = vsyncpa [#allocation4], 1
    %s1950 = scalar_lea.sflag [#allocation4], 1
    %1951 = vsyncpa %s1950, 1
    %1952 = vsyncpa [#allocation7], 1
    %1953 = vsyncpa [#allocation5], 1
    %s1954 = scalar_lea.sflag [#allocation5], 1
    %1955 = vsyncpa %s1954, 1

</llo_original>
